<compile_context>
chip_gen: v7x
topology: tpu7x:2x2x1
jax: 0.10.0
libtpu: 0.0.40
codegen_flags: <defaults>
</compile_context>

<pallas_src>
import jax
import jax.numpy as jnp
from jax.experimental import pallas as pl
from jax.experimental.pallas import tpu as pltpu

EMB_SIZE = 32
NUM_HEADS = 4
HEAD_DIM = EMB_SIZE // NUM_HEADS
SEQ_LEN = 8
BATCH = 2
LANE = 128          # padded lane width for weight columns and the output block


def mha_kernel(x_ref, wqkv_ref, bqkv_ref, wo_ref, bo_ref, o_ref):
    M, E = x_ref.shape                      # M = B*N flattened rows, E lanes
    H, D, N = NUM_HEADS, HEAD_DIM, SEQ_LEN
    B = M // N
    # NOTE: matches the torch module -- scaling by sqrt(emb_size), not sqrt(head_dim).
    inv_scale = jnp.float32(1.0 / (EMB_SIZE ** 0.5))

    x2 = x_ref[...]                                                   # (M, E) f32

    # ---- Fused Q|K|V projection: one matmul into a 128-lane padded block. ----
    qkv = jnp.dot(x2, wqkv_ref[...],
                  preferred_element_type=jnp.float32) + bqkv_ref[...]  # (M, 128)

    q = qkv[:, 0 * E:1 * E].reshape(B, N, E)
    k = qkv[:, 1 * E:2 * E].reshape(B, N, E)
    v = qkv[:, 2 * E:3 * E].reshape(B, N, E)

    # ---- Head separation via lane masks (no D-wide lane slices / relayouts). ----
    # mask_h[0, 0, e] = 1 iff lane e belongs to head h.
    lane = jax.lax.broadcasted_iota(jnp.int32, (1, 1, E), 2)
    masks = [((lane >= h * D) & (lane < (h + 1) * D)).astype(jnp.float32)
             for h in range(H)]

    # Full-lane-width copies stacked on the leading axis (same lane layout for
    # every block, so this is plain vreg stacking): row block z = h*B + b.
    qb = jnp.concatenate([q] * H, axis=0)                    # (H*B, N, E)
    kb = jnp.concatenate([k * m for m in masks], axis=0)     # (H*B, N, E) head-masked
    vb = jnp.concatenate([v * m for m in masks], axis=0)     # (H*B, N, E) head-masked

    # ---- Scores for all (head, batch) pairs in ONE batched matmul. ----
    # Contraction runs over all E lanes; masked lanes contribute exactly 0, so
    # this equals the per-head D-lane contraction.
    scores = jnp.einsum('zqe,zke->zqk', qb, kb,
                        preferred_element_type=jnp.float32) * inv_scale  # (H*B, N, N)

    # Numerically-stable softmax in f32 (att_drop is identity in eval mode).
    m_ = jnp.max(scores, axis=-1, keepdims=True)
    p = jnp.exp(scores - m_)
    att = p / jnp.sum(p, axis=-1, keepdims=True)

    # ---- Context: ONE batched matmul.  vb is head-masked, so row block h only
    # populates head-h lanes; merging heads ('(h b) n d -> b n (h d)') is a
    # plain sum of the leading-axis blocks (disjoint lanes), no concat. ----
    ctx = jnp.einsum('zqk,zke->zqe', att, vb,
                     preferred_element_type=jnp.float32)                 # (H*B, N, E)
    merged = ctx[0:B]
    for h in range(1, H):
        merged = merged + ctx[h * B:(h + 1) * B]                         # (B, N, E)

    # ---- Output projection into a 128-lane padded block (full-lane store). ----
    o_ref[...] = (jnp.dot(merged.reshape(M, E), wo_ref[...],
                          preferred_element_type=jnp.float32)
                  + bo_ref[...]).astype(o_ref.dtype)                     # (M, 128)


def multi_head_attention(x, params):
    """x: (B, N, E) float32.  params holds the pre-fused / pre-padded weights
    built once in init_params: wqkv (E,128), bqkv (1,128), wo_p (E,128), bo_p (1,128)."""
    B, N, E = x.shape
    M = B * N
    x2 = x.reshape(M, E)          # lane-dense 2-D kernel input

    out_p = pl.pallas_call(
        mha_kernel,
        out_shape=jax.ShapeDtypeStruct((M, LANE), x.dtype),
        grid_spec=pltpu.PrefetchScalarGridSpec(
            num_scalar_prefetch=0,
            grid=(1,),                      # single step on all chips (latency-bound)
            in_specs=[
                pl.BlockSpec((M, E), lambda i: (0, 0)),
                pl.BlockSpec((E, LANE), lambda i: (0, 0)),
                pl.BlockSpec((1, LANE), lambda i: (0, 0)),
                pl.BlockSpec((E, LANE), lambda i: (0, 0)),
                pl.BlockSpec((1, LANE), lambda i: (0, 0)),
            ],
            out_specs=pl.BlockSpec((M, LANE), lambda i: (0, 0)),
        ),
        compiler_params=pltpu.CompilerParams(
            dimension_semantics=("arbitrary",)),
    )(x2, params["wqkv"], params["bqkv"], params["wo_p"], params["bo_p"])

    # Strip lane padding, restore (B, N, E) -- free slice + reshape in XLA.
    return out_p[:, :E].reshape(B, N, E)


def init_params(key, emb_size):
    keys = jax.random.split(key, 8)
    w_scale = float(emb_size) ** -0.5
    b_scale = 0.1

    def w(k_):
        return (w_scale * jax.random.normal(k_, (emb_size, emb_size))).astype(jnp.float32)

    def b(k_):
        return (b_scale * jax.random.normal(k_, (1, emb_size))).astype(jnp.float32)

    p = {
        "wq": w(keys[0]), "bq": b(keys[1]),
        "wk": w(keys[2]), "bk": b(keys[3]),
        "wv": w(keys[4]), "bv": b(keys[5]),
        "wo": w(keys[6]), "bo": b(keys[7]),
    }

    # One-time (hoisted) kernel-layout prep: fuse Q|K|V along output columns and
    # zero-pad every weight/bias column dim to a full 128-lane block so the
    # in-kernel matmul results and the final store are lane-dense.
    assert 3 * emb_size <= LANE
    def pad_cols(a):
        return jnp.pad(a, ((0, 0), (0, LANE - a.shape[1])))

    p["wqkv"] = pad_cols(jnp.concatenate([p["wq"], p["wk"], p["wv"]], axis=1))  # (E,128)
    p["bqkv"] = pad_cols(jnp.concatenate([p["bq"], p["bk"], p["bv"]], axis=1))  # (1,128)
    p["wo_p"] = pad_cols(p["wo"])                                               # (E,128)
    p["bo_p"] = pad_cols(p["bo"])                                               # (1,128)
    return p


def reference_mha(x, params):
    """Pure-JAX f32 reference matching the PyTorch module (mask=None, eval)."""
    B, N, E = x.shape
    H, D = NUM_HEADS, E // NUM_HEADS
    q = x @ params["wq"] + params["bq"]
    k = x @ params["wk"] + params["bk"]
    v = x @ params["wv"] + params["bv"]
    # 'b n (h d) -> b h n d'
    q = q.reshape(B, N, H, D).transpose(0, 2, 1, 3)
    k = k.reshape(B, N, H, D).transpose(0, 2, 1, 3)
    v = v.reshape(B, N, H, D).transpose(0, 2, 1, 3)
    energy = jnp.einsum("bhqd,bhkd->bhqk", q, k)
    att = jax.nn.softmax(energy / (EMB_SIZE ** 0.5), axis=-1)
    out = jnp.einsum("bhal,bhlv->bhav", att, v)
    out = out.transpose(0, 2, 1, 3).reshape(B, N, E)
    return out @ params["wo"] + params["bo"]


if __name__ == "__main__":
    key = jax.random.PRNGKey(0)
    kx, kp = jax.random.split(key)
    x = jax.random.normal(kx, (BATCH, SEQ_LEN, EMB_SIZE), dtype=jnp.float32)
    params = init_params(kp, EMB_SIZE)

    out = jax.block_until_ready(multi_head_attention(x, params))
    ref = reference_mha(x, params)

    assert out.shape == (BATCH, SEQ_LEN, EMB_SIZE)
    # All operands are f32; tolerance still allows for the TPU MXU's internal
    # reduced-precision passes under default matmul precision.
    max_err = float(jnp.max(jnp.abs(out - ref)))
    assert max_err < 5e-2, "max abs diff = %f" % max_err
    print("KERNEL_OK")
</pallas_src>

<mosaic_0001>
module attributes {stable_mosaic.version = 11 : i64} {
  func.func @mha_kernel(%arg0: i32, %arg1: memref<16x32xf32, #tpu.memory_space<vmem>>, %arg2: memref<32x128xf32, #tpu.memory_space<vmem>>, %arg3: memref<1x128xf32, #tpu.memory_space<vmem>>, %arg4: memref<32x128xf32, #tpu.memory_space<vmem>>, %arg5: memref<1x128xf32, #tpu.memory_space<vmem>>, %arg6: memref<16x128xf32, #tpu.memory_space<vmem>>) attributes {dimension_semantics = [#tpu.dimension_semantics<arbitrary>], iteration_bounds = array<i64: 1>, scalar_prefetch = 0 : i64, scratch_operands = 0 : i64, tpu.core_type = #tpu.core_type<tc>, window_params = [{pipeline_mode = #tpu.pipeline_mode<synchronous>, transform_indices = @transform_0, window_bounds = array<i64: 16, 32>}, {pipeline_mode = #tpu.pipeline_mode<synchronous>, transform_indices = @transform_1, window_bounds = array<i64: 32, 128>}, {pipeline_mode = #tpu.pipeline_mode<synchronous>, transform_indices = @transform_2, window_bounds = array<i64: 1, 128>}, {pipeline_mode = #tpu.pipeline_mode<synchronous>, transform_indices = @transform_3, window_bounds = array<i64: 32, 128>}, {pipeline_mode = #tpu.pipeline_mode<synchronous>, transform_indices = @transform_4, window_bounds = array<i64: 1, 128>}, {pipeline_mode = #tpu.pipeline_mode<synchronous>, transform_indices = @transform_5, window_bounds = array<i64: 16, 128>}]} {
    %c0 = arith.constant 0 : index
    %c0_0 = arith.constant 0 : index
    %0 = vector.load %arg1[%c0, %c0_0] : memref<16x32xf32, #tpu.memory_space<vmem>>, vector<16x32xf32>
    %c0_1 = arith.constant 0 : index
    %c0_2 = arith.constant 0 : index
    %1 = vector.load %arg2[%c0_1, %c0_2] : memref<32x128xf32, #tpu.memory_space<vmem>>, vector<32x128xf32>
    %cst = arith.constant dense<0.000000e+00> : vector<16x128xf32>
    %2 = tpu.matmul %0, %1, %cst {dimension_numbers = #tpu.dot_dimension_numbers<[1], [0], [0], [1], [0, 0, 1, 1], [], []>} : vector<16x32xf32>, vector<32x128xf32>, vector<16x128xf32> -> vector<16x128xf32>
    %c0_3 = arith.constant 0 : index
    %c0_4 = arith.constant 0 : index
    %3 = vector.load %arg3[%c0_3, %c0_4] : memref<1x128xf32, #tpu.memory_space<vmem>>, vector<1x128xf32>
    %4 = vector.broadcast %3 : vector<1x128xf32> to vector<16x128xf32>
    %5 = arith.addf %2, %4 : vector<16x128xf32>
    %6 = vector.extract_strided_slice %5 {offsets = [0, 0], sizes = [16, 32], strides = [1, 1]} : vector<16x128xf32> to vector<16x32xf32>
    %7 = vector.shape_cast %6 : vector<16x32xf32> to vector<2x8x32xf32>
    %8 = vector.extract_strided_slice %5 {offsets = [0, 32], sizes = [16, 32], strides = [1, 1]} : vector<16x128xf32> to vector<16x32xf32>
    %9 = vector.shape_cast %8 : vector<16x32xf32> to vector<2x8x32xf32>
    %10 = vector.extract_strided_slice %5 {offsets = [0, 64], sizes = [16, 32], strides = [1, 1]} : vector<16x128xf32> to vector<16x32xf32>
    %11 = vector.shape_cast %10 : vector<16x32xf32> to vector<2x8x32xf32>
    %12 = tpu.iota {dimensions = array<i32: 2>} : vector<1x1x32xi32>
    %c0_i32 = arith.constant 0 : i32
    %13 = vector.broadcast %c0_i32 : i32 to vector<1x1x32xi32>
    %14 = arith.cmpi sge, %12, %13 : vector<1x1x32xi32>
    %c8_i32 = arith.constant 8 : i32
    %15 = vector.broadcast %c8_i32 : i32 to vector<1x1x32xi32>
    %16 = arith.cmpi slt, %12, %15 : vector<1x1x32xi32>
    %17 = arith.andi %14, %16 : vector<1x1x32xi1>
    %18 = arith.extui %17 : vector<1x1x32xi1> to vector<1x1x32xi32>
    %19 = arith.sitofp %18 : vector<1x1x32xi32> to vector<1x1x32xf32>
    %c8_i32_5 = arith.constant 8 : i32
    %20 = vector.broadcast %c8_i32_5 : i32 to vector<1x1x32xi32>
    %21 = arith.cmpi sge, %12, %20 : vector<1x1x32xi32>
    %c16_i32 = arith.constant 16 : i32
    %22 = vector.broadcast %c16_i32 : i32 to vector<1x1x32xi32>
    %23 = arith.cmpi slt, %12, %22 : vector<1x1x32xi32>
    %24 = arith.andi %21, %23 : vector<1x1x32xi1>
    %25 = arith.extui %24 : vector<1x1x32xi1> to vector<1x1x32xi32>
    %26 = arith.sitofp %25 : vector<1x1x32xi32> to vector<1x1x32xf32>
    %c16_i32_6 = arith.constant 16 : i32
    %27 = vector.broadcast %c16_i32_6 : i32 to vector<1x1x32xi32>
    %28 = arith.cmpi sge, %12, %27 : vector<1x1x32xi32>
    %c24_i32 = arith.constant 24 : i32
    %29 = vector.broadcast %c24_i32 : i32 to vector<1x1x32xi32>
    %30 = arith.cmpi slt, %12, %29 : vector<1x1x32xi32>
    %31 = arith.andi %28, %30 : vector<1x1x32xi1>
    %32 = arith.extui %31 : vector<1x1x32xi1> to vector<1x1x32xi32>
    %33 = arith.sitofp %32 : vector<1x1x32xi32> to vector<1x1x32xf32>
    %c24_i32_7 = arith.constant 24 : i32
    %34 = vector.broadcast %c24_i32_7 : i32 to vector<1x1x32xi32>
    %35 = arith.cmpi sge, %12, %34 : vector<1x1x32xi32>
    %c32_i32 = arith.constant 32 : i32
    %36 = vector.broadcast %c32_i32 : i32 to vector<1x1x32xi32>
    %37 = arith.cmpi slt, %12, %36 : vector<1x1x32xi32>
    %38 = arith.andi %35, %37 : vector<1x1x32xi1>
    %39 = arith.extui %38 : vector<1x1x32xi1> to vector<1x1x32xi32>
    %40 = arith.sitofp %39 : vector<1x1x32xi32> to vector<1x1x32xf32>
    %41 = tpu.concatenate %7, %7, %7, %7 in 0 : vector<2x8x32xf32>, vector<2x8x32xf32>, vector<2x8x32xf32>, vector<2x8x32xf32> -> vector<8x8x32xf32>
    %42 = vector.broadcast %19 : vector<1x1x32xf32> to vector<2x8x32xf32>
    %43 = arith.mulf %9, %42 : vector<2x8x32xf32>
    %44 = vector.broadcast %26 : vector<1x1x32xf32> to vector<2x8x32xf32>
    %45 = arith.mulf %9, %44 : vector<2x8x32xf32>
    %46 = vector.broadcast %33 : vector<1x1x32xf32> to vector<2x8x32xf32>
    %47 = arith.mulf %9, %46 : vector<2x8x32xf32>
    %48 = vector.broadcast %40 : vector<1x1x32xf32> to vector<2x8x32xf32>
    %49 = arith.mulf %9, %48 : vector<2x8x32xf32>
    %50 = tpu.concatenate %43, %45, %47, %49 in 0 : vector<2x8x32xf32>, vector<2x8x32xf32>, vector<2x8x32xf32>, vector<2x8x32xf32> -> vector<8x8x32xf32>
    %51 = vector.broadcast %19 : vector<1x1x32xf32> to vector<2x8x32xf32>
    %52 = arith.mulf %11, %51 : vector<2x8x32xf32>
    %53 = vector.broadcast %26 : vector<1x1x32xf32> to vector<2x8x32xf32>
    %54 = arith.mulf %11, %53 : vector<2x8x32xf32>
    %55 = vector.broadcast %33 : vector<1x1x32xf32> to vector<2x8x32xf32>
    %56 = arith.mulf %11, %55 : vector<2x8x32xf32>
    %57 = vector.broadcast %40 : vector<1x1x32xf32> to vector<2x8x32xf32>
    %58 = arith.mulf %11, %57 : vector<2x8x32xf32>
    %59 = tpu.concatenate %52, %54, %56, %58 in 0 : vector<2x8x32xf32>, vector<2x8x32xf32>, vector<2x8x32xf32>, vector<2x8x32xf32> -> vector<8x8x32xf32>
    "tpu.trace_start"() <{level = 10 : i32, message = "zqe,zke->zqk"}> : () -> ()
    %cst_8 = arith.constant dense<0.000000e+00> : vector<8x8x8xf32>
    %60 = tpu.matmul %41, %50, %cst_8 {dimension_numbers = #tpu.dot_dimension_numbers<[2], [2], [1], [1], [0, 0, 0, 1, 1, 1], [0], [0]>} : vector<8x8x32xf32>, vector<8x8x32xf32>, vector<8x8x8xf32> -> vector<8x8x8xf32>
    "tpu.trace_stop"() : () -> ()
    %cst_9 = arith.constant 0.176776692 : f32
    %61 = vector.broadcast %cst_9 : f32 to vector<8x8x8xf32>
    %62 = arith.mulf %60, %61 : vector<8x8x8xf32>
    %cst_10 = arith.constant dense<0xFF800000> : vector<8x8xf32>
    %63 = vector.multi_reduction <maximumf>, %62, %cst_10 [2] : vector<8x8x8xf32> to vector<8x8xf32>
    %64 = vector.shape_cast %63 : vector<8x8xf32> to vector<8x8x1xf32>
    %65 = vector.broadcast %64 : vector<8x8x1xf32> to vector<8x8x8xf32>
    %66 = arith.subf %62, %65 : vector<8x8x8xf32>
    %67 = math.exp %66 : vector<8x8x8xf32>
    %cst_11 = arith.constant dense<0.000000e+00> : vector<8x8xf32>
    %68 = vector.multi_reduction <add>, %67, %cst_11 [2] : vector<8x8x8xf32> to vector<8x8xf32>
    %69 = vector.shape_cast %68 : vector<8x8xf32> to vector<8x8x1xf32>
    %70 = vector.broadcast %69 : vector<8x8x1xf32> to vector<8x8x8xf32>
    %71 = arith.divf %67, %70 : vector<8x8x8xf32>
    "tpu.trace_start"() <{level = 10 : i32, message = "zqk,zke->zqe"}> : () -> ()
    %cst_12 = arith.constant dense<0.000000e+00> : vector<8x8x32xf32>
    %72 = tpu.matmul %71, %59, %cst_12 {dimension_numbers = #tpu.dot_dimension_numbers<[2], [1], [1], [2], [0, 0, 0, 1, 1, 2], [0], [0]>} : vector<8x8x8xf32>, vector<8x8x32xf32>, vector<8x8x32xf32> -> vector<8x8x32xf32>
    "tpu.trace_stop"() : () -> ()
    %73 = vector.extract_strided_slice %72 {offsets = [0, 0, 0], sizes = [2, 8, 32], strides = [1, 1, 1]} : vector<8x8x32xf32> to vector<2x8x32xf32>
    %74 = vector.extract_strided_slice %72 {offsets = [2, 0, 0], sizes = [2, 8, 32], strides = [1, 1, 1]} : vector<8x8x32xf32> to vector<2x8x32xf32>
    %75 = arith.addf %73, %74 : vector<2x8x32xf32>
    %76 = vector.extract_strided_slice %72 {offsets = [4, 0, 0], sizes = [2, 8, 32], strides = [1, 1, 1]} : vector<8x8x32xf32> to vector<2x8x32xf32>
    %77 = arith.addf %75, %76 : vector<2x8x32xf32>
    %78 = vector.extract_strided_slice %72 {offsets = [6, 0, 0], sizes = [2, 8, 32], strides = [1, 1, 1]} : vector<8x8x32xf32> to vector<2x8x32xf32>
    %79 = arith.addf %77, %78 : vector<2x8x32xf32>
    %80 = vector.shape_cast %79 : vector<2x8x32xf32> to vector<16x32xf32>
    %c0_13 = arith.constant 0 : index
    %c0_14 = arith.constant 0 : index
    %81 = vector.load %arg4[%c0_13, %c0_14] : memref<32x128xf32, #tpu.memory_space<vmem>>, vector<32x128xf32>
    %cst_15 = arith.constant dense<0.000000e+00> : vector<16x128xf32>
    %82 = tpu.matmul %80, %81, %cst_15 {dimension_numbers = #tpu.dot_dimension_numbers<[1], [0], [0], [1], [0, 0, 1, 1], [], []>} : vector<16x32xf32>, vector<32x128xf32>, vector<16x128xf32> -> vector<16x128xf32>
    %c0_16 = arith.constant 0 : index
    %c0_17 = arith.constant 0 : index
    %83 = vector.load %arg5[%c0_16, %c0_17] : memref<1x128xf32, #tpu.memory_space<vmem>>, vector<1x128xf32>
    %84 = vector.broadcast %83 : vector<1x128xf32> to vector<16x128xf32>
    %85 = arith.addf %82, %84 : vector<16x128xf32>
    %c0_18 = arith.constant 0 : index
    %c0_19 = arith.constant 0 : index
    %86 = vector.load %arg6[%c0_18, %c0_19] : memref<16x128xf32, #tpu.memory_space<vmem>>, vector<16x128xf32>
    tpu.vector_store %arg6[%c0_18, %c0_19], %85 {strides = array<i32>} : memref<16x128xf32, #tpu.memory_space<vmem>>, vector<16x128xf32>,
    return
  }
  func.func @transform_0(%arg0: i32) -> (i32, i32) {
    %c0_i32 = arith.constant 0 : i32
    %c0_i32_0 = arith.constant 0 : i32
    %c0_i32_1 = arith.constant 0 : i32
    return %c0_i32, %c0_i32_0 : i32, i32
  }
  func.func @transform_1(%arg0: i32) -> (i32, i32) {
    %c0_i32 = arith.constant 0 : i32
    %c0_i32_0 = arith.constant 0 : i32
    %c0_i32_1 = arith.constant 0 : i32
    return %c0_i32, %c0_i32_0 : i32, i32
  }
  func.func @transform_2(%arg0: i32) -> (i32, i32) {
    %c0_i32 = arith.constant 0 : i32
    %c0_i32_0 = arith.constant 0 : i32
    %c0_i32_1 = arith.constant 0 : i32
    return %c0_i32, %c0_i32_0 : i32, i32
  }
  func.func @transform_3(%arg0: i32) -> (i32, i32) {
    %c0_i32 = arith.constant 0 : i32
    %c0_i32_0 = arith.constant 0 : i32
    %c0_i32_1 = arith.constant 0 : i32
    return %c0_i32, %c0_i32_0 : i32, i32
  }
  func.func @transform_4(%arg0: i32) -> (i32, i32) {
    %c0_i32 = arith.constant 0 : i32
    %c0_i32_0 = arith.constant 0 : i32
    %c0_i32_1 = arith.constant 0 : i32
    return %c0_i32, %c0_i32_0 : i32, i32
  }
  func.func @transform_5(%arg0: i32) -> (i32, i32) {
    %c0_i32 = arith.constant 0 : i32
    %c0_i32_0 = arith.constant 0 : i32
    %c0_i32_1 = arith.constant 0 : i32
    return %c0_i32, %c0_i32_0 : i32, i32
  }
}

</mosaic_0001>

<llo_original>
// kernel: tpu_custom_call.1
$region0: #{tpu_custom_call.1}
  #allocation0 [shape = 'u32[]', space=smem, size = 0x4, offset = 0x4, fixed_abs, tag = 'smem constant byte address 0x4 - core index']
  #allocation1 [shape = 'u32[144,128]{1,0:T(1,128)}', space=vmem, size = 0x12000, scoped, tag = 'internal scratch']
  %s0 = inlined_call_operand.hbm [shape: f32[16,32], index: 0, kind: input, shape index: {}]
  %s1 = inlined_call_operand.hbm [shape: f32[32,128], index: 1, kind: input, shape index: {}]
  %s2 = inlined_call_operand.vmem [shape: f32[1,128], index: 2, kind: input, shape index: {}]
  %s3 = inlined_call_operand.hbm [shape: f32[32,128], index: 3, kind: input, shape index: {}]
  %s4 = inlined_call_operand.vmem [shape: f32[1,128], index: 4, kind: input, shape index: {}]
  %s5 = inlined_call_operand.hbm [shape: f32[16,128], index: 5, kind: output, shape index: {}]
  %s6 = sld [smem:[#allocation0]]
  $region42: #{tpu_custom_call.1} parent=0
    _
  %s8 = ssub.s32 1, %s6
  %s9 = scalar_select 0, %s8, %s6
  $region1: #{tpu_custom_call.1} parent=0
    #allocation2 [shape = 'u8[8192]{0}', space=vmem, size = 0x2000, scoped, tag = 'input window, operand 0, single buffered']
    #allocation3 [shape = 's32[1]{0}', space=sflag, size = 0x4, scoped, tag = 'scoped memory for tpu_custom_call.1']
    #allocation4 [shape = 's32[1]{0}', space=sflag, size = 0x4, scoped, tag = 'scoped memory for tpu_custom_call.1']
    #allocation5 [shape = 'u8[16384]{0}', space=vmem, size = 0x4000, scoped, tag = 'input window, operand 1, single buffered']
    #allocation6 [shape = 's32[1]{0}', space=sflag, size = 0x4, scoped, tag = 'scoped memory for tpu_custom_call.1']
    #allocation7 [shape = 'u8[16384]{0}', space=vmem, size = 0x4000, scoped, tag = 'input window, operand 3, single buffered']
    #allocation8 [shape = 'u8[8192]{0}', space=vmem, size = 0x2000, scoped, tag = 'output window, operand 0, single buffered']
    %10 = vsyncpa [#allocation3], 0
    %11 = vsyncpa [#allocation6], 0
    %12 = vsyncpa [#allocation4], 0
    // Predicated region
    $region2: #{tpu_custom_call.1} parent=1 // pred_check
      _
    $region3: #{tpu_custom_call.1} parent=1 // pred_check_branch
      %14 = sbr.rel (0) target = $region5
    $region4: #{tpu_custom_call.1} parent=1 // pred_region
      %s16 = ssub.s32 256, 256
      %17 = vsyncadd [#allocation3], %s16
      %s18 = sshll.u32 [#allocation2], 4
      %s19 = int_to_ptr.vmem [resolvable:$true] %s18
      %24 = dma.hbm_to_vmem [thread:$0]  %s0, 256, %s19, [#allocation3], 128, 128, 8
    $region5: #{tpu_custom_call.1} parent=1 // pred_fallthru
      _
    // Predicated region
    $region6: #{tpu_custom_call.1} parent=1 // pred_check
      _
    $region7: #{tpu_custom_call.1} parent=1 // pred_check_branch
      %26 = sbr.rel (0) target = $region9
    $region8: #{tpu_custom_call.1} parent=1 // pred_region
      %s28 = ssub.s32 512, 512
      %29 = vsyncadd [#allocation6], %s28
      %s30 = sshll.u32 [#allocation5], 4
      %s31 = int_to_ptr.vmem [resolvable:$true] %s30
      %36 = dma.hbm_to_vmem [thread:$0]  %s1, 512, %s31, [#allocation6], 128, 128, 8
    $region9: #{tpu_custom_call.1} parent=1 // pred_fallthru
      _
    // Predicated region
    $region10: #{tpu_custom_call.1} parent=1 // pred_check
      _
    $region11: #{tpu_custom_call.1} parent=1 // pred_check_branch
      %38 = sbr.rel (0) target = $region13
    $region12: #{tpu_custom_call.1} parent=1 // pred_region
      _
    $region13: #{tpu_custom_call.1} parent=1 // pred_fallthru
      _
    // Predicated region
    $region14: #{tpu_custom_call.1} parent=1 // pred_check
      _
    $region15: #{tpu_custom_call.1} parent=1 // pred_check_branch
      %40 = sbr.rel (0) target = $region17
    $region16: #{tpu_custom_call.1} parent=1 // pred_region
      %s42 = ssub.s32 512, 512
      %43 = vsyncadd [#allocation6], %s42
      %s44 = sshll.u32 [#allocation7], 4
      %s45 = int_to_ptr.vmem [resolvable:$true] %s44
      %50 = dma.hbm_to_vmem [thread:$0]  %s3, 512, %s45, [#allocation6], 128, 128, 8
    $region17: #{tpu_custom_call.1} parent=1 // pred_fallthru
      _
    // Predicated region
    $region18: #{tpu_custom_call.1} parent=1 // pred_check
      _
    $region19: #{tpu_custom_call.1} parent=1 // pred_check_branch
      %52 = sbr.rel (0) target = $region21
    $region20: #{tpu_custom_call.1} parent=1 // pred_region
      _
    $region21: #{tpu_custom_call.1} parent=1 // pred_fallthru
      _
    // Predicated region
    $region22: #{tpu_custom_call.1} parent=1 // pred_check
      _
    $region23: #{tpu_custom_call.1} parent=1 // pred_check_branch
      %54 = sbr.rel (0) target = $region25
    $region24: #{tpu_custom_call.1} parent=1 // pred_region
      %55 = dma.done [#allocation3], 256
    $region25: #{tpu_custom_call.1} parent=1 // pred_fallthru
      _
    // Predicated region
    $region26: #{tpu_custom_call.1} parent=1 // pred_check
      _
    $region27: #{tpu_custom_call.1} parent=1 // pred_check_branch
      %57 = sbr.rel (0) target = $region29
    $region28: #{tpu_custom_call.1} parent=1 // pred_region
      %58 = dma.done [#allocation6], 512
    $region29: #{tpu_custom_call.1} parent=1 // pred_fallthru
      _
    // Predicated region
    $region30: #{tpu_custom_call.1} parent=1 // pred_check
      _
    $region31: #{tpu_custom_call.1} parent=1 // pred_check_branch
      %60 = sbr.rel (0) target = $region33
    $region32: #{tpu_custom_call.1} parent=1 // pred_region
      %61 = dma.done [#allocation6], 512
    $region33: #{tpu_custom_call.1} parent=1 // pred_fallthru
      _
    %v62 = vld [vmem:[#allocation2] sm:$0xff]
    %v63 = vld [vmem:[#allocation2 + $0x8] sm:$0xff]
    %v64 = vld [vmem:[#allocation5] sm:$0xff]
    %v65 = vld [vmem:[#allocation5 + $0x8] sm:$0xff]
    %v66 = vld [vmem:[#allocation5 + $0x10] sm:$0xff]
    %v67 = vld [vmem:[#allocation5 + $0x18] sm:$0xff]
    %v68 = vld [vmem:[%s2] sm:$0x1]
    %v70 = vlaneseq
    %v71 = vshrl.u32 %v70, 7
    %v72 = vsub.s32 0, %v71
    %v73 = vrot.slane %v68, %v72
    %vm75 = vcmask 261120
    %v77 = vsel %vm75, %v62, 0
    %v80 = vsel %vm75, %v63, 0
    %82 = vmatprep.subr.mxu0 0.0
    %83 = vmatpush1.msra.mxu0 %v64
    %84 = vmatprep.subr.mxu0 0.0
    %85 = vmatpush1.msra.mxu0 %v65
    %86 = vmatprep.subr.mxu0 0.0
    %87 = vmatpush1.msra.mxu0 %v66
    %88 = vmatprep.subr.mxu0 0.0
    %89 = vmatpush1.msra.mxu0 %v67
    %90 = vmatprep.subr.mxu0 0.0
    %91 = vmatpush1.msra.mxu0 0.0
    %92 = vmatprep.subr.mxu0 0.0
    %93 = vmatpush1.msra.mxu0 0.0
    %94 = vmatprep.subr.mxu0 0.0
    %95 = vmatpush1.msra.mxu0 0.0
    %96 = vmatprep.subr.mxu0 0.0
    %97 = vmatpush1.msra.mxu0 0.0
    %98 = vmatprep.subr.mxu0 0.0
    %99 = vmatpush1.msra.mxu0 0.0
    %100 = vmatprep.subr.mxu0 0.0
    %101 = vmatpush1.msra.mxu0 0.0
    %102 = vmatprep.subr.mxu0 0.0
    %103 = vmatpush1.msra.mxu0 0.0
    %104 = vmatprep.subr.mxu0 0.0
    %105 = vmatpush1.msra.mxu0 0.0
    %106 = vmatprep.subr.mxu0 0.0
    %107 = vmatpush1.msra.mxu0 0.0
    %108 = vmatprep.subr.mxu0 0.0
    %109 = vmatpush1.msra.mxu0 0.0
    %110 = vmatprep.subr.mxu0 0.0
    %111 = vmatpush1.msra.mxu0 0.0
    %112 = vmatprep.subr.mxu0 0.0
    %113 = vmatpush1.msra.mxu0 0.0
    %114 = vmatprep.subr.mxu0 0.0
    %115 = vmatpush1.msra.mxu0 0.0
    %116 = vmatprep.subr.mxu0 0.0
    %117 = vmatpush1.msra.mxu0 0.0
    %118 = vmatprep.subr.mxu0 0.0
    %119 = vmatpush1.msra.mxu0 0.0
    %120 = vmatprep.subr.mxu0 0.0
    %121 = vmatpush1.msra.mxu0 0.0
    %122 = vmatprep.subr.mxu0 0.0
    %123 = vmatpush1.msra.mxu0 0.0
    %124 = vmatprep.subr.mxu0 0.0
    %125 = vmatpush1.msra.mxu0 0.0
    %126 = vmatprep.subr.mxu0 0.0
    %127 = vmatpush1.msra.mxu0 0.0
    %128 = vmatprep.subr.mxu0 0.0
    %129 = vmatpush1.msra.mxu0 0.0
    %130 = vmatprep.subr.mxu0 0.0
    %131 = vmatpush1.msra.mxu0 0.0
    %132 = vmatprep.subr.mxu0 0.0
    %133 = vmatpush1.msra.mxu0 0.0
    %134 = vmatprep.subr.mxu0 0.0
    %135 = vmatpush1.msra.mxu0 0.0
    %136 = vmatprep.subr.mxu0 0.0
    %137 = vmatpush1.msra.mxu0 0.0
    %138 = vmatprep.subr.mxu0 0.0
    %139 = vmatpush1.msra.mxu0 0.0
    %140 = vmatprep.subr.mxu0 0.0
    %141 = vmatpush1.msra.mxu0 0.0
    %142 = vmatprep.subr.mxu0 0.0
    %143 = vmatpush1.msra.mxu0 0.0
    %144 = vmatprep.subr.mxu0 0.0
    %145 = vmatpush1.msra.mxu0 0.0
    %146 = vmatprep.mubr.f32.mxu0 0.0
    %147 = vmatmul.mubr.f32.gmra.mrb[0].mxu0 %v77
    %v148 = vpop.f32.mrb[0].mxu0
    %v149 = vadd.f32 %v73, %v148
    %v150 = vpop.f32.mrb[0].mxu0
    %151 = vmatprep.mubr.f32.mxu0 0.0
    %152 = vmatmul.mubr.f32.gmra.mrb[0].mxu0 %v80
    %v153 = vpop.f32.mrb[0].mxu0
    %v154 = vadd.f32 %v73, %v153
    %v155 = vpop.f32.mrb[0].mxu0
    %156 = vdwg.mxu0
    %v157 = vlaneseq
    %v158 = vand.u32 %v157, 127
    %vm159 = vcmp.ge.s32.totalorder %v158, 0
    %vm160 = vcmp.lt.s32.totalorder %v158, 8
    %vm161 = vmand %vm159, %vm160
    %v162 = vsel %vm161, 1, 0
    %v163 = vcvt.s32.f32 %v162
    %vm164 = vcmp.ge.s32.totalorder %v158, 8
    %vm165 = vcmp.lt.s32.totalorder %v158, 16
    %vm166 = vmand %vm164, %vm165
    %v167 = vsel %vm166, 1, 0
    %v168 = vcvt.s32.f32 %v167
    %vm169 = vcmp.ge.s32.totalorder %v158, 16
    %vm170 = vcmp.lt.s32.totalorder %v158, 24
    %vm171 = vmand %vm169, %vm170
    %v172 = vsel %vm171, 1, 0
    %v173 = vcvt.s32.f32 %v172
    %vm174 = vcmp.ge.s32.totalorder %v158, 24
    %vm175 = vcmp.lt.s32.totalorder %v158, 32
    %vm176 = vmand %vm174, %vm175
    %v177 = vsel %vm176, 1, 0
    %v178 = vcvt.s32.f32 %v177
    %180 = vrot.lane.b32.xlu0 %v163, 32
    %v181 = vpop.permute.xlu0 %180
    %v183 = vmul.f32 %v149, %v181
    %v184 = vmul.f32 %v154, %v181
    %186 = vrot.lane.b32.xlu0 %v168, 32
    %v187 = vpop.permute.xlu0 %186
    %v189 = vmul.f32 %v149, %v187
    %v190 = vmul.f32 %v154, %v187
    %192 = vrot.lane.b32.xlu0 %v173, 32
    %v193 = vpop.permute.xlu0 %192
    %v195 = vmul.f32 %v149, %v193
    %v196 = vmul.f32 %v154, %v193
    %198 = vrot.lane.b32.xlu0 %v178, 32
    %v199 = vpop.permute.xlu0 %198
    %v201 = vmul.f32 %v149, %v199
    %v202 = vmul.f32 %v154, %v199
    %203 = vrot.lane.b32.xlu0 %v163, 64
    %v204 = vpop.permute.xlu0 %203
    %v206 = vmul.f32 %v149, %v204
    %v207 = vmul.f32 %v154, %v204
    %208 = vrot.lane.b32.xlu0 %v168, 64
    %v209 = vpop.permute.xlu0 %208
    %v211 = vmul.f32 %v149, %v209
    %v212 = vmul.f32 %v154, %v209
    %213 = vrot.lane.b32.xlu0 %v173, 64
    %v214 = vpop.permute.xlu0 %213
    %v216 = vmul.f32 %v149, %v214
    %v217 = vmul.f32 %v154, %v214
    %218 = vrot.lane.b32.xlu0 %v178, 64
    %v219 = vpop.permute.xlu0 %218
    %v221 = vmul.f32 %v149, %v219
    %v222 = vmul.f32 %v154, %v219
    %224 = vrot.lane.b32.xlu0 %v183, 96
    %v225 = vpop.permute.xlu0 %224
    %v227 = vsel %vm75, %v149, 0
    %v229 = vsel %vm75, %v225, 0
    %231 = vmatprep.subr.mxu0 0.0
    %232 = vmatpush1.xpose.msra.mxu0 %v229
    %233 = vmatprep.subr.mxu0 0.0
    %234 = vmatpush1.xpose.msra.mxu0 0.0
    %235 = vmatprep.subr.mxu0 0.0
    %236 = vmatpush1.xpose.msra.mxu0 0.0
    %237 = vmatprep.subr.mxu0 0.0
    %238 = vmatpush1.xpose.msra.mxu0 0.0
    %239 = vmatprep.subr.mxu0 0.0
    %240 = vmatpush1.xpose.msra.mxu0 0.0
    %241 = vmatprep.subr.mxu0 0.0
    %242 = vmatpush1.xpose.msra.mxu0 0.0
    %243 = vmatprep.subr.mxu0 0.0
    %244 = vmatpush1.xpose.msra.mxu0 0.0
    %245 = vmatprep.subr.mxu0 0.0
    %246 = vmatpush1.xpose.msra.mxu0 0.0
    %247 = vmatprep.subr.mxu0 0.0
    %248 = vmatpush1.xpose.msra.mxu0 0.0
    %249 = vmatprep.subr.mxu0 0.0
    %250 = vmatpush1.xpose.msra.mxu0 0.0
    %251 = vmatprep.subr.mxu0 0.0
    %252 = vmatpush1.xpose.msra.mxu0 0.0
    %253 = vmatprep.subr.mxu0 0.0
    %254 = vmatpush1.xpose.msra.mxu0 0.0
    %255 = vmatprep.subr.mxu0 0.0
    %256 = vmatpush1.xpose.msra.mxu0 0.0
    %257 = vmatprep.subr.mxu0 0.0
    %258 = vmatpush1.xpose.msra.mxu0 0.0
    %259 = vmatprep.subr.mxu0 0.0
    %260 = vmatpush1.xpose.msra.mxu0 0.0
    %261 = vmatprep.subr.mxu0 0.0
    %262 = vmatpush1.xpose.msra.mxu0 0.0
    %263 = vmatprep.subr.mxu0 0.0
    %264 = vmatpush1.xpose.msra.mxu0 0.0
    %265 = vmatprep.subr.mxu0 0.0
    %266 = vmatpush1.xpose.msra.mxu0 0.0
    %267 = vmatprep.subr.mxu0 0.0
    %268 = vmatpush1.xpose.msra.mxu0 0.0
    %269 = vmatprep.subr.mxu0 0.0
    %270 = vmatpush1.xpose.msra.mxu0 0.0
    %271 = vmatprep.subr.mxu0 0.0
    %272 = vmatpush1.xpose.msra.mxu0 0.0
    %273 = vmatprep.subr.mxu0 0.0
    %274 = vmatpush1.xpose.msra.mxu0 0.0
    %275 = vmatprep.subr.mxu0 0.0
    %276 = vmatpush1.xpose.msra.mxu0 0.0
    %277 = vmatprep.subr.mxu0 0.0
    %278 = vmatpush1.xpose.msra.mxu0 0.0
    %279 = vmatprep.subr.mxu0 0.0
    %280 = vmatpush1.xpose.msra.mxu0 0.0
    %281 = vmatprep.subr.mxu0 0.0
    %282 = vmatpush1.xpose.msra.mxu0 0.0
    %283 = vmatprep.subr.mxu0 0.0
    %284 = vmatpush1.xpose.msra.mxu0 0.0
    %285 = vmatprep.subr.mxu0 0.0
    %286 = vmatpush1.xpose.msra.mxu0 0.0
    %287 = vmatprep.subr.mxu0 0.0
    %288 = vmatpush1.xpose.msra.mxu0 0.0
    %289 = vmatprep.subr.mxu0 0.0
    %290 = vmatpush1.xpose.msra.mxu0 0.0
    %291 = vmatprep.subr.mxu0 0.0
    %292 = vmatpush1.xpose.msra.mxu0 0.0
    %293 = vmatprep.subr.mxu0 0.0
    %294 = vmatpush1.xpose.msra.mxu0 0.0
    %295 = vmatprep.mubr.f32.mxu0 0.0
    %296 = vmatmul.mubr.f32.gmra.mrb[0].mxu0 %v227
    %v297 = vpop.f32.mrb[0].mxu0
    %v298 = vadd.f32 0.0, %v297
    %v299 = vpop.f32.mrb[0].mxu0
    %300 = vdwg.mxu0
    %302 = vrot.lane.b32.xlu0 %v184, 96
    %v303 = vpop.permute.xlu0 %302
    %v305 = vsel %vm75, %v154, 0
    %v307 = vsel %vm75, %v303, 0
    %309 = vmatprep.subr.mxu0 0.0
    %310 = vmatpush1.xpose.msra.mxu0 %v307
    %311 = vmatprep.subr.mxu0 0.0
    %312 = vmatpush1.xpose.msra.mxu0 0.0
    %313 = vmatprep.subr.mxu0 0.0
    %314 = vmatpush1.xpose.msra.mxu0 0.0
    %315 = vmatprep.subr.mxu0 0.0
    %316 = vmatpush1.xpose.msra.mxu0 0.0
    %317 = vmatprep.subr.mxu0 0.0
    %318 = vmatpush1.xpose.msra.mxu0 0.0
    %319 = vmatprep.subr.mxu0 0.0
    %320 = vmatpush1.xpose.msra.mxu0 0.0
    %321 = vmatprep.subr.mxu0 0.0
    %322 = vmatpush1.xpose.msra.mxu0 0.0
    %323 = vmatprep.subr.mxu0 0.0
    %324 = vmatpush1.xpose.msra.mxu0 0.0
    %325 = vmatprep.subr.mxu0 0.0
    %326 = vmatpush1.xpose.msra.mxu0 0.0
    %327 = vmatprep.subr.mxu0 0.0
    %328 = vmatpush1.xpose.msra.mxu0 0.0
    %329 = vmatprep.subr.mxu0 0.0
    %330 = vmatpush1.xpose.msra.mxu0 0.0
    %331 = vmatprep.subr.mxu0 0.0
    %332 = vmatpush1.xpose.msra.mxu0 0.0
    %333 = vmatprep.subr.mxu0 0.0
    %334 = vmatpush1.xpose.msra.mxu0 0.0
    %335 = vmatprep.subr.mxu0 0.0
    %336 = vmatpush1.xpose.msra.mxu0 0.0
    %337 = vmatprep.subr.mxu0 0.0
    %338 = vmatpush1.xpose.msra.mxu0 0.0
    %339 = vmatprep.subr.mxu0 0.0
    %340 = vmatpush1.xpose.msra.mxu0 0.0
    %341 = vmatprep.subr.mxu0 0.0
    %342 = vmatpush1.xpose.msra.mxu0 0.0
    %343 = vmatprep.subr.mxu0 0.0
    %344 = vmatpush1.xpose.msra.mxu0 0.0
    %345 = vmatprep.subr.mxu0 0.0
    %346 = vmatpush1.xpose.msra.mxu0 0.0
    %347 = vmatprep.subr.mxu0 0.0
    %348 = vmatpush1.xpose.msra.mxu0 0.0
    %349 = vmatprep.subr.mxu0 0.0
    %350 = vmatpush1.xpose.msra.mxu0 0.0
    %351 = vmatprep.subr.mxu0 0.0
    %352 = vmatpush1.xpose.msra.mxu0 0.0
    %353 = vmatprep.subr.mxu0 0.0
    %354 = vmatpush1.xpose.msra.mxu0 0.0
    %355 = vmatprep.subr.mxu0 0.0
    %356 = vmatpush1.xpose.msra.mxu0 0.0
    %357 = vmatprep.subr.mxu0 0.0
    %358 = vmatpush1.xpose.msra.mxu0 0.0
    %359 = vmatprep.subr.mxu0 0.0
    %360 = vmatpush1.xpose.msra.mxu0 0.0
    %361 = vmatprep.subr.mxu0 0.0
    %362 = vmatpush1.xpose.msra.mxu0 0.0
    %363 = vmatprep.subr.mxu0 0.0
    %364 = vmatpush1.xpose.msra.mxu0 0.0
    %365 = vmatprep.subr.mxu0 0.0
    %366 = vmatpush1.xpose.msra.mxu0 0.0
    %367 = vmatprep.subr.mxu0 0.0
    %368 = vmatpush1.xpose.msra.mxu0 0.0
    %369 = vmatprep.subr.mxu0 0.0
    %370 = vmatpush1.xpose.msra.mxu0 0.0
    %371 = vmatprep.subr.mxu0 0.0
    %372 = vmatpush1.xpose.msra.mxu0 0.0
    %373 = vmatprep.mubr.f32.mxu0 0.0
    %374 = vmatmul.mubr.f32.gmra.mrb[0].mxu0 %v305
    %v375 = vpop.f32.mrb[0].mxu0
    %v376 = vadd.f32 0.0, %v375
    %v377 = vpop.f32.mrb[0].mxu0
    %378 = vdwg.mxu0
    %380 = vrot.lane.b32.xlu0 %v189, 96
    %v381 = vpop.permute.xlu0 %380
    %v382 = vsel %vm75, %v381, 0
    %384 = vmatprep.subr.mxu0 0.0
    %385 = vmatpush1.xpose.msra.mxu0 %v382
    %386 = vmatprep.subr.mxu0 0.0
    %387 = vmatpush1.xpose.msra.mxu0 0.0
    %388 = vmatprep.subr.mxu0 0.0
    %389 = vmatpush1.xpose.msra.mxu0 0.0
    %390 = vmatprep.subr.mxu0 0.0
    %391 = vmatpush1.xpose.msra.mxu0 0.0
    %392 = vmatprep.subr.mxu0 0.0
    %393 = vmatpush1.xpose.msra.mxu0 0.0
    %394 = vmatprep.subr.mxu0 0.0
    %395 = vmatpush1.xpose.msra.mxu0 0.0
    %396 = vmatprep.subr.mxu0 0.0
    %397 = vmatpush1.xpose.msra.mxu0 0.0
    %398 = vmatprep.subr.mxu0 0.0
    %399 = vmatpush1.xpose.msra.mxu0 0.0
    %400 = vmatprep.subr.mxu0 0.0
    %401 = vmatpush1.xpose.msra.mxu0 0.0
    %402 = vmatprep.subr.mxu0 0.0
    %403 = vmatpush1.xpose.msra.mxu0 0.0
    %404 = vmatprep.subr.mxu0 0.0
    %405 = vmatpush1.xpose.msra.mxu0 0.0
    %406 = vmatprep.subr.mxu0 0.0
    %407 = vmatpush1.xpose.msra.mxu0 0.0
    %408 = vmatprep.subr.mxu0 0.0
    %409 = vmatpush1.xpose.msra.mxu0 0.0
    %410 = vmatprep.subr.mxu0 0.0
    %411 = vmatpush1.xpose.msra.mxu0 0.0
    %412 = vmatprep.subr.mxu0 0.0
    %413 = vmatpush1.xpose.msra.mxu0 0.0
    %414 = vmatprep.subr.mxu0 0.0
    %415 = vmatpush1.xpose.msra.mxu0 0.0
    %416 = vmatprep.subr.mxu0 0.0
    %417 = vmatpush1.xpose.msra.mxu0 0.0
    %418 = vmatprep.subr.mxu0 0.0
    %419 = vmatpush1.xpose.msra.mxu0 0.0
    %420 = vmatprep.subr.mxu0 0.0
    %421 = vmatpush1.xpose.msra.mxu0 0.0
    %422 = vmatprep.subr.mxu0 0.0
    %423 = vmatpush1.xpose.msra.mxu0 0.0
    %424 = vmatprep.subr.mxu0 0.0
    %425 = vmatpush1.xpose.msra.mxu0 0.0
    %426 = vmatprep.subr.mxu0 0.0
    %427 = vmatpush1.xpose.msra.mxu0 0.0
    %428 = vmatprep.subr.mxu0 0.0
    %429 = vmatpush1.xpose.msra.mxu0 0.0
    %430 = vmatprep.subr.mxu0 0.0
    %431 = vmatpush1.xpose.msra.mxu0 0.0
    %432 = vmatprep.subr.mxu0 0.0
    %433 = vmatpush1.xpose.msra.mxu0 0.0
    %434 = vmatprep.subr.mxu0 0.0
    %435 = vmatpush1.xpose.msra.mxu0 0.0
    %436 = vmatprep.subr.mxu0 0.0
    %437 = vmatpush1.xpose.msra.mxu0 0.0
    %438 = vmatprep.subr.mxu0 0.0
    %439 = vmatpush1.xpose.msra.mxu0 0.0
    %440 = vmatprep.subr.mxu0 0.0
    %441 = vmatpush1.xpose.msra.mxu0 0.0
    %442 = vmatprep.subr.mxu0 0.0
    %443 = vmatpush1.xpose.msra.mxu0 0.0
    %444 = vmatprep.subr.mxu0 0.0
    %445 = vmatpush1.xpose.msra.mxu0 0.0
    %446 = vmatprep.subr.mxu0 0.0
    %447 = vmatpush1.xpose.msra.mxu0 0.0
    %448 = vmatprep.mubr.f32.mxu0 0.0
    %449 = vmatmul.mubr.f32.gmra.mrb[0].mxu0 %v227
    %v450 = vpop.f32.mrb[0].mxu0
    %v451 = vadd.f32 0.0, %v450
    %v452 = vpop.f32.mrb[0].mxu0
    %453 = vdwg.mxu0
    %455 = vrot.lane.b32.xlu0 %v190, 96
    %v456 = vpop.permute.xlu0 %455
    %v457 = vsel %vm75, %v456, 0
    %459 = vmatprep.subr.mxu0 0.0
    %460 = vmatpush1.xpose.msra.mxu0 %v457
    %461 = vmatprep.subr.mxu0 0.0
    %462 = vmatpush1.xpose.msra.mxu0 0.0
    %463 = vmatprep.subr.mxu0 0.0
    %464 = vmatpush1.xpose.msra.mxu0 0.0
    %465 = vmatprep.subr.mxu0 0.0
    %466 = vmatpush1.xpose.msra.mxu0 0.0
    %467 = vmatprep.subr.mxu0 0.0
    %468 = vmatpush1.xpose.msra.mxu0 0.0
    %469 = vmatprep.subr.mxu0 0.0
    %470 = vmatpush1.xpose.msra.mxu0 0.0
    %471 = vmatprep.subr.mxu0 0.0
    %472 = vmatpush1.xpose.msra.mxu0 0.0
    %473 = vmatprep.subr.mxu0 0.0
    %474 = vmatpush1.xpose.msra.mxu0 0.0
    %475 = vmatprep.subr.mxu0 0.0
    %476 = vmatpush1.xpose.msra.mxu0 0.0
    %477 = vmatprep.subr.mxu0 0.0
    %478 = vmatpush1.xpose.msra.mxu0 0.0
    %479 = vmatprep.subr.mxu0 0.0
    %480 = vmatpush1.xpose.msra.mxu0 0.0
    %481 = vmatprep.subr.mxu0 0.0
    %482 = vmatpush1.xpose.msra.mxu0 0.0
    %483 = vmatprep.subr.mxu0 0.0
    %484 = vmatpush1.xpose.msra.mxu0 0.0
    %485 = vmatprep.subr.mxu0 0.0
    %486 = vmatpush1.xpose.msra.mxu0 0.0
    %487 = vmatprep.subr.mxu0 0.0
    %488 = vmatpush1.xpose.msra.mxu0 0.0
    %489 = vmatprep.subr.mxu0 0.0
    %490 = vmatpush1.xpose.msra.mxu0 0.0
    %491 = vmatprep.subr.mxu0 0.0
    %492 = vmatpush1.xpose.msra.mxu0 0.0
    %493 = vmatprep.subr.mxu0 0.0
    %494 = vmatpush1.xpose.msra.mxu0 0.0
    %495 = vmatprep.subr.mxu0 0.0
    %496 = vmatpush1.xpose.msra.mxu0 0.0
    %497 = vmatprep.subr.mxu0 0.0
    %498 = vmatpush1.xpose.msra.mxu0 0.0
    %499 = vmatprep.subr.mxu0 0.0
    %500 = vmatpush1.xpose.msra.mxu0 0.0
    %501 = vmatprep.subr.mxu0 0.0
    %502 = vmatpush1.xpose.msra.mxu0 0.0
    %503 = vmatprep.subr.mxu0 0.0
    %504 = vmatpush1.xpose.msra.mxu0 0.0
    %505 = vmatprep.subr.mxu0 0.0
    %506 = vmatpush1.xpose.msra.mxu0 0.0
    %507 = vmatprep.subr.mxu0 0.0
    %508 = vmatpush1.xpose.msra.mxu0 0.0
    %509 = vmatprep.subr.mxu0 0.0
    %510 = vmatpush1.xpose.msra.mxu0 0.0
    %511 = vmatprep.subr.mxu0 0.0
    %512 = vmatpush1.xpose.msra.mxu0 0.0
    %513 = vmatprep.subr.mxu0 0.0
    %514 = vmatpush1.xpose.msra.mxu0 0.0
    %515 = vmatprep.subr.mxu0 0.0
    %516 = vmatpush1.xpose.msra.mxu0 0.0
    %517 = vmatprep.subr.mxu0 0.0
    %518 = vmatpush1.xpose.msra.mxu0 0.0
    %519 = vmatprep.subr.mxu0 0.0
    %520 = vmatpush1.xpose.msra.mxu0 0.0
    %521 = vmatprep.subr.mxu0 0.0
    %522 = vmatpush1.xpose.msra.mxu0 0.0
    %523 = vmatprep.mubr.f32.mxu0 0.0
    %524 = vmatmul.mubr.f32.gmra.mrb[0].mxu0 %v305
    %v525 = vpop.f32.mrb[0].mxu0
    %v526 = vadd.f32 0.0, %v525
    %v527 = vpop.f32.mrb[0].mxu0
    %528 = vdwg.mxu0
    %530 = vrot.lane.b32.xlu0 %v195, 96
    %v531 = vpop.permute.xlu0 %530
    %v532 = vsel %vm75, %v531, 0
    %534 = vmatprep.subr.mxu0 0.0
    %535 = vmatpush1.xpose.msra.mxu0 %v532
    %536 = vmatprep.subr.mxu0 0.0
    %537 = vmatpush1.xpose.msra.mxu0 0.0
    %538 = vmatprep.subr.mxu0 0.0
    %539 = vmatpush1.xpose.msra.mxu0 0.0
    %540 = vmatprep.subr.mxu0 0.0
    %541 = vmatpush1.xpose.msra.mxu0 0.0
    %542 = vmatprep.subr.mxu0 0.0
    %543 = vmatpush1.xpose.msra.mxu0 0.0
    %544 = vmatprep.subr.mxu0 0.0
    %545 = vmatpush1.xpose.msra.mxu0 0.0
    %546 = vmatprep.subr.mxu0 0.0
    %547 = vmatpush1.xpose.msra.mxu0 0.0
    %548 = vmatprep.subr.mxu0 0.0
    %549 = vmatpush1.xpose.msra.mxu0 0.0
    %550 = vmatprep.subr.mxu0 0.0
    %551 = vmatpush1.xpose.msra.mxu0 0.0
    %552 = vmatprep.subr.mxu0 0.0
    %553 = vmatpush1.xpose.msra.mxu0 0.0
    %554 = vmatprep.subr.mxu0 0.0
    %555 = vmatpush1.xpose.msra.mxu0 0.0
    %556 = vmatprep.subr.mxu0 0.0
    %557 = vmatpush1.xpose.msra.mxu0 0.0
    %558 = vmatprep.subr.mxu0 0.0
    %559 = vmatpush1.xpose.msra.mxu0 0.0
    %560 = vmatprep.subr.mxu0 0.0
    %561 = vmatpush1.xpose.msra.mxu0 0.0
    %562 = vmatprep.subr.mxu0 0.0
    %563 = vmatpush1.xpose.msra.mxu0 0.0
    %564 = vmatprep.subr.mxu0 0.0
    %565 = vmatpush1.xpose.msra.mxu0 0.0
    %566 = vmatprep.subr.mxu0 0.0
    %567 = vmatpush1.xpose.msra.mxu0 0.0
    %568 = vmatprep.subr.mxu0 0.0
    %569 = vmatpush1.xpose.msra.mxu0 0.0
    %570 = vmatprep.subr.mxu0 0.0
    %571 = vmatpush1.xpose.msra.mxu0 0.0
    %572 = vmatprep.subr.mxu0 0.0
    %573 = vmatpush1.xpose.msra.mxu0 0.0
    %574 = vmatprep.subr.mxu0 0.0
    %575 = vmatpush1.xpose.msra.mxu0 0.0
    %576 = vmatprep.subr.mxu0 0.0
    %577 = vmatpush1.xpose.msra.mxu0 0.0
    %578 = vmatprep.subr.mxu0 0.0
    %579 = vmatpush1.xpose.msra.mxu0 0.0
    %580 = vmatprep.subr.mxu0 0.0
    %581 = vmatpush1.xpose.msra.mxu0 0.0
    %582 = vmatprep.subr.mxu0 0.0
    %583 = vmatpush1.xpose.msra.mxu0 0.0
    %584 = vmatprep.subr.mxu0 0.0
    %585 = vmatpush1.xpose.msra.mxu0 0.0
    %586 = vmatprep.subr.mxu0 0.0
    %587 = vmatpush1.xpose.msra.mxu0 0.0
    %588 = vmatprep.subr.mxu0 0.0
    %589 = vmatpush1.xpose.msra.mxu0 0.0
    %590 = vmatprep.subr.mxu0 0.0
    %591 = vmatpush1.xpose.msra.mxu0 0.0
    %592 = vmatprep.subr.mxu0 0.0
    %593 = vmatpush1.xpose.msra.mxu0 0.0
    %594 = vmatprep.subr.mxu0 0.0
    %595 = vmatpush1.xpose.msra.mxu0 0.0
    %596 = vmatprep.subr.mxu0 0.0
    %597 = vmatpush1.xpose.msra.mxu0 0.0
    %598 = vmatprep.mubr.f32.mxu0 0.0
    %599 = vmatmul.mubr.f32.gmra.mrb[0].mxu0 %v227
    %v600 = vpop.f32.mrb[0].mxu0
    %v601 = vadd.f32 0.0, %v600
    %v602 = vpop.f32.mrb[0].mxu0
    %603 = vdwg.mxu0
    %605 = vrot.lane.b32.xlu0 %v196, 96
    %v606 = vpop.permute.xlu0 %605
    %v607 = vsel %vm75, %v606, 0
    %609 = vmatprep.subr.mxu0 0.0
    %610 = vmatpush1.xpose.msra.mxu0 %v607
    %611 = vmatprep.subr.mxu0 0.0
    %612 = vmatpush1.xpose.msra.mxu0 0.0
    %613 = vmatprep.subr.mxu0 0.0
    %614 = vmatpush1.xpose.msra.mxu0 0.0
    %615 = vmatprep.subr.mxu0 0.0
    %616 = vmatpush1.xpose.msra.mxu0 0.0
    %617 = vmatprep.subr.mxu0 0.0
    %618 = vmatpush1.xpose.msra.mxu0 0.0
    %619 = vmatprep.subr.mxu0 0.0
    %620 = vmatpush1.xpose.msra.mxu0 0.0
    %621 = vmatprep.subr.mxu0 0.0
    %622 = vmatpush1.xpose.msra.mxu0 0.0
    %623 = vmatprep.subr.mxu0 0.0
    %624 = vmatpush1.xpose.msra.mxu0 0.0
    %625 = vmatprep.subr.mxu0 0.0
    %626 = vmatpush1.xpose.msra.mxu0 0.0
    %627 = vmatprep.subr.mxu0 0.0
    %628 = vmatpush1.xpose.msra.mxu0 0.0
    %629 = vmatprep.subr.mxu0 0.0
    %630 = vmatpush1.xpose.msra.mxu0 0.0
    %631 = vmatprep.subr.mxu0 0.0
    %632 = vmatpush1.xpose.msra.mxu0 0.0
    %633 = vmatprep.subr.mxu0 0.0
    %634 = vmatpush1.xpose.msra.mxu0 0.0
    %635 = vmatprep.subr.mxu0 0.0
    %636 = vmatpush1.xpose.msra.mxu0 0.0
    %637 = vmatprep.subr.mxu0 0.0
    %638 = vmatpush1.xpose.msra.mxu0 0.0
    %639 = vmatprep.subr.mxu0 0.0
    %640 = vmatpush1.xpose.msra.mxu0 0.0
    %641 = vmatprep.subr.mxu0 0.0
    %642 = vmatpush1.xpose.msra.mxu0 0.0
    %643 = vmatprep.subr.mxu0 0.0
    %644 = vmatpush1.xpose.msra.mxu0 0.0
    %645 = vmatprep.subr.mxu0 0.0
    %646 = vmatpush1.xpose.msra.mxu0 0.0
    %647 = vmatprep.subr.mxu0 0.0
    %648 = vmatpush1.xpose.msra.mxu0 0.0
    %649 = vmatprep.subr.mxu0 0.0
    %650 = vmatpush1.xpose.msra.mxu0 0.0
    %651 = vmatprep.subr.mxu0 0.0
    %652 = vmatpush1.xpose.msra.mxu0 0.0
    %653 = vmatprep.subr.mxu0 0.0
    %654 = vmatpush1.xpose.msra.mxu0 0.0
    %655 = vmatprep.subr.mxu0 0.0
    %656 = vmatpush1.xpose.msra.mxu0 0.0
    %657 = vmatprep.subr.mxu0 0.0
    %658 = vmatpush1.xpose.msra.mxu0 0.0
    %659 = vmatprep.subr.mxu0 0.0
    %660 = vmatpush1.xpose.msra.mxu0 0.0
    %661 = vmatprep.subr.mxu0 0.0
    %662 = vmatpush1.xpose.msra.mxu0 0.0
    %663 = vmatprep.subr.mxu0 0.0
    %664 = vmatpush1.xpose.msra.mxu0 0.0
    %665 = vmatprep.subr.mxu0 0.0
    %666 = vmatpush1.xpose.msra.mxu0 0.0
    %667 = vmatprep.subr.mxu0 0.0
    %668 = vmatpush1.xpose.msra.mxu0 0.0
    %669 = vmatprep.subr.mxu0 0.0
    %670 = vmatpush1.xpose.msra.mxu0 0.0
    %671 = vmatprep.subr.mxu0 0.0
    %672 = vmatpush1.xpose.msra.mxu0 0.0
    %673 = vmatprep.mubr.f32.mxu0 0.0
    %674 = vmatmul.mubr.f32.gmra.mrb[0].mxu0 %v305
    %v675 = vpop.f32.mrb[0].mxu0
    %v676 = vadd.f32 0.0, %v675
    %v677 = vpop.f32.mrb[0].mxu0
    %678 = vdwg.mxu0
    %680 = vrot.lane.b32.xlu0 %v201, 96
    %v681 = vpop.permute.xlu0 %680
    %v682 = vsel %vm75, %v681, 0
    %684 = vmatprep.subr.mxu0 0.0
    %685 = vmatpush1.xpose.msra.mxu0 %v682
    %686 = vmatprep.subr.mxu0 0.0
    %687 = vmatpush1.xpose.msra.mxu0 0.0
    %688 = vmatprep.subr.mxu0 0.0
    %689 = vmatpush1.xpose.msra.mxu0 0.0
    %690 = vmatprep.subr.mxu0 0.0
    %691 = vmatpush1.xpose.msra.mxu0 0.0
    %692 = vmatprep.subr.mxu0 0.0
    %693 = vmatpush1.xpose.msra.mxu0 0.0
    %694 = vmatprep.subr.mxu0 0.0
    %695 = vmatpush1.xpose.msra.mxu0 0.0
    %696 = vmatprep.subr.mxu0 0.0
    %697 = vmatpush1.xpose.msra.mxu0 0.0
    %698 = vmatprep.subr.mxu0 0.0
    %699 = vmatpush1.xpose.msra.mxu0 0.0
    %700 = vmatprep.subr.mxu0 0.0
    %701 = vmatpush1.xpose.msra.mxu0 0.0
    %702 = vmatprep.subr.mxu0 0.0
    %703 = vmatpush1.xpose.msra.mxu0 0.0
    %704 = vmatprep.subr.mxu0 0.0
    %705 = vmatpush1.xpose.msra.mxu0 0.0
    %706 = vmatprep.subr.mxu0 0.0
    %707 = vmatpush1.xpose.msra.mxu0 0.0
    %708 = vmatprep.subr.mxu0 0.0
    %709 = vmatpush1.xpose.msra.mxu0 0.0
    %710 = vmatprep.subr.mxu0 0.0
    %711 = vmatpush1.xpose.msra.mxu0 0.0
    %712 = vmatprep.subr.mxu0 0.0
    %713 = vmatpush1.xpose.msra.mxu0 0.0
    %714 = vmatprep.subr.mxu0 0.0
    %715 = vmatpush1.xpose.msra.mxu0 0.0
    %716 = vmatprep.subr.mxu0 0.0
    %717 = vmatpush1.xpose.msra.mxu0 0.0
    %718 = vmatprep.subr.mxu0 0.0
    %719 = vmatpush1.xpose.msra.mxu0 0.0
    %720 = vmatprep.subr.mxu0 0.0
    %721 = vmatpush1.xpose.msra.mxu0 0.0
    %722 = vmatprep.subr.mxu0 0.0
    %723 = vmatpush1.xpose.msra.mxu0 0.0
    %724 = vmatprep.subr.mxu0 0.0
    %725 = vmatpush1.xpose.msra.mxu0 0.0
    %726 = vmatprep.subr.mxu0 0.0
    %727 = vmatpush1.xpose.msra.mxu0 0.0
    %728 = vmatprep.subr.mxu0 0.0
    %729 = vmatpush1.xpose.msra.mxu0 0.0
    %730 = vmatprep.subr.mxu0 0.0
    %731 = vmatpush1.xpose.msra.mxu0 0.0
    %732 = vmatprep.subr.mxu0 0.0
    %733 = vmatpush1.xpose.msra.mxu0 0.0
    %734 = vmatprep.subr.mxu0 0.0
    %735 = vmatpush1.xpose.msra.mxu0 0.0
    %736 = vmatprep.subr.mxu0 0.0
    %737 = vmatpush1.xpose.msra.mxu0 0.0
    %738 = vmatprep.subr.mxu0 0.0
    %739 = vmatpush1.xpose.msra.mxu0 0.0
    %740 = vmatprep.subr.mxu0 0.0
    %741 = vmatpush1.xpose.msra.mxu0 0.0
    %742 = vmatprep.subr.mxu0 0.0
    %743 = vmatpush1.xpose.msra.mxu0 0.0
    %744 = vmatprep.subr.mxu0 0.0
    %745 = vmatpush1.xpose.msra.mxu0 0.0
    %746 = vmatprep.subr.mxu0 0.0
    %747 = vmatpush1.xpose.msra.mxu0 0.0
    %748 = vmatprep.mubr.f32.mxu0 0.0
    %749 = vmatmul.mubr.f32.gmra.mrb[0].mxu0 %v227
    %v750 = vpop.f32.mrb[0].mxu0
    %v751 = vadd.f32 0.0, %v750
    %v752 = vpop.f32.mrb[0].mxu0
    %753 = vdwg.mxu0
    %755 = vrot.lane.b32.xlu0 %v202, 96
    %v756 = vpop.permute.xlu0 %755
    %v757 = vsel %vm75, %v756, 0
    %759 = vmatprep.subr.mxu0 0.0
    %760 = vmatpush1.xpose.msra.mxu0 %v757
    %761 = vmatprep.subr.mxu0 0.0
    %762 = vmatpush1.xpose.msra.mxu0 0.0
    %763 = vmatprep.subr.mxu0 0.0
    %764 = vmatpush1.xpose.msra.mxu0 0.0
    %765 = vmatprep.subr.mxu0 0.0
    %766 = vmatpush1.xpose.msra.mxu0 0.0
    %767 = vmatprep.subr.mxu0 0.0
    %768 = vmatpush1.xpose.msra.mxu0 0.0
    %769 = vmatprep.subr.mxu0 0.0
    %770 = vmatpush1.xpose.msra.mxu0 0.0
    %771 = vmatprep.subr.mxu0 0.0
    %772 = vmatpush1.xpose.msra.mxu0 0.0
    %773 = vmatprep.subr.mxu0 0.0
    %774 = vmatpush1.xpose.msra.mxu0 0.0
    %775 = vmatprep.subr.mxu0 0.0
    %776 = vmatpush1.xpose.msra.mxu0 0.0
    %777 = vmatprep.subr.mxu0 0.0
    %778 = vmatpush1.xpose.msra.mxu0 0.0
    %779 = vmatprep.subr.mxu0 0.0
    %780 = vmatpush1.xpose.msra.mxu0 0.0
    %781 = vmatprep.subr.mxu0 0.0
    %782 = vmatpush1.xpose.msra.mxu0 0.0
    %783 = vmatprep.subr.mxu0 0.0
    %784 = vmatpush1.xpose.msra.mxu0 0.0
    %785 = vmatprep.subr.mxu0 0.0
    %786 = vmatpush1.xpose.msra.mxu0 0.0
    %787 = vmatprep.subr.mxu0 0.0
    %788 = vmatpush1.xpose.msra.mxu0 0.0
    %789 = vmatprep.subr.mxu0 0.0
    %790 = vmatpush1.xpose.msra.mxu0 0.0
    %791 = vmatprep.subr.mxu0 0.0
    %792 = vmatpush1.xpose.msra.mxu0 0.0
    %793 = vmatprep.subr.mxu0 0.0
    %794 = vmatpush1.xpose.msra.mxu0 0.0
    %795 = vmatprep.subr.mxu0 0.0
    %796 = vmatpush1.xpose.msra.mxu0 0.0
    %797 = vmatprep.subr.mxu0 0.0
    %798 = vmatpush1.xpose.msra.mxu0 0.0
    %799 = vmatprep.subr.mxu0 0.0
    %800 = vmatpush1.xpose.msra.mxu0 0.0
    %801 = vmatprep.subr.mxu0 0.0
    %802 = vmatpush1.xpose.msra.mxu0 0.0
    %803 = vmatprep.subr.mxu0 0.0
    %804 = vmatpush1.xpose.msra.mxu0 0.0
    %805 = vmatprep.subr.mxu0 0.0
    %806 = vmatpush1.xpose.msra.mxu0 0.0
    %807 = vmatprep.subr.mxu0 0.0
    %808 = vmatpush1.xpose.msra.mxu0 0.0
    %809 = vmatprep.subr.mxu0 0.0
    %810 = vmatpush1.xpose.msra.mxu0 0.0
    %811 = vmatprep.subr.mxu0 0.0
    %812 = vmatpush1.xpose.msra.mxu0 0.0
    %813 = vmatprep.subr.mxu0 0.0
    %814 = vmatpush1.xpose.msra.mxu0 0.0
    %815 = vmatprep.subr.mxu0 0.0
    %816 = vmatpush1.xpose.msra.mxu0 0.0
    %817 = vmatprep.subr.mxu0 0.0
    %818 = vmatpush1.xpose.msra.mxu0 0.0
    %819 = vmatprep.subr.mxu0 0.0
    %820 = vmatpush1.xpose.msra.mxu0 0.0
    %821 = vmatprep.subr.mxu0 0.0
    %822 = vmatpush1.xpose.msra.mxu0 0.0
    %823 = vmatprep.mubr.f32.mxu0 0.0
    %824 = vmatmul.mubr.f32.gmra.mrb[0].mxu0 %v305
    %v825 = vpop.f32.mrb[0].mxu0
    %v826 = vadd.f32 0.0, %v825
    %v827 = vpop.f32.mrb[0].mxu0
    %828 = vdwg.mxu0
    %v829 = vmul.f32 %v298, 0.17677669
    %v830 = vmul.f32 %v376, 0.17677669
    %v831 = vmul.f32 %v451, 0.17677669
    %v832 = vmul.f32 %v526, 0.17677669
    %v833 = vmul.f32 %v601, 0.17677669
    %v834 = vmul.f32 %v676, 0.17677669
    %v835 = vmul.f32 %v751, 0.17677669
    %v836 = vmul.f32 %v826, 0.17677669
    %vm837 = vcmask 64512
    %v838 = vsel %vm837, %v829, -inf
    %839 = vmax.xlane.f32.xlu0 %v838
    %v840 = vpop.xlane.xlu0 %839
    %v841 = vsel %vm837, %v830, -inf
    %842 = vmax.xlane.f32.xlu0 %v841
    %v843 = vpop.xlane.xlu0 %842
    %v844 = vsel %vm837, %v831, -inf
    %845 = vmax.xlane.f32.xlu0 %v844
    %v846 = vpop.xlane.xlu0 %845
    %v847 = vsel %vm837, %v832, -inf
    %848 = vmax.xlane.f32.xlu0 %v847
    %v849 = vpop.xlane.xlu0 %848
    %v850 = vsel %vm837, %v833, -inf
    %851 = vmax.xlane.f32.xlu0 %v850
    %v852 = vpop.xlane.xlu0 %851
    %v853 = vsel %vm837, %v834, -inf
    %854 = vmax.xlane.f32.xlu0 %v853
    %v855 = vpop.xlane.xlu0 %854
    %v856 = vsel %vm837, %v835, -inf
    %857 = vmax.xlane.f32.xlu0 %v856
    %v858 = vpop.xlane.xlu0 %857
    %v859 = vsel %vm837, %v836, -inf
    %860 = vmax.xlane.f32.xlu0 %v859
    %v861 = vpop.xlane.xlu0 %860
    %v862 = vsub.f32 %v829, %v840
    %v863 = vsub.f32 %v830, %v843
    %v864 = vsub.f32 %v831, %v846
    %v865 = vsub.f32 %v832, %v849
    %v866 = vsub.f32 %v833, %v852
    %v867 = vsub.f32 %v834, %v855
    %v868 = vsub.f32 %v835, %v858
    %v869 = vsub.f32 %v836, %v861
    %v870 = vmul.f32 %v862, 1.442695
    %v871 = vpow.pop %v870
    %v872 = vmul.f32 %v863, 1.442695
    %v873 = vpow.pop %v872
    %v874 = vmul.f32 %v864, 1.442695
    %v875 = vpow.pop %v874
    %v876 = vmul.f32 %v865, 1.442695
    %v877 = vpow.pop %v876
    %v878 = vmul.f32 %v866, 1.442695
    %v879 = vpow.pop %v878
    %v880 = vmul.f32 %v867, 1.442695
    %v881 = vpow.pop %v880
    %v882 = vmul.f32 %v868, 1.442695
    %v883 = vpow.pop %v882
    %v884 = vmul.f32 %v869, 1.442695
    %v885 = vpow.pop %v884
    %v886 = vsel %vm837, %v871, 0.0
    %887 = vadd.xlane.f32.xlu0 %v886
    %v888 = vpop.xlane.xlu0 %887
    %v889 = vsel %vm837, %v873, 0.0
    %890 = vadd.xlane.f32.xlu0 %v889
    %v891 = vpop.xlane.xlu0 %890
    %v892 = vsel %vm837, %v875, 0.0
    %893 = vadd.xlane.f32.xlu0 %v892
    %v894 = vpop.xlane.xlu0 %893
    %v895 = vsel %vm837, %v877, 0.0
    %896 = vadd.xlane.f32.xlu0 %v895
    %v897 = vpop.xlane.xlu0 %896
    %v898 = vsel %vm837, %v879, 0.0
    %899 = vadd.xlane.f32.xlu0 %v898
    %v900 = vpop.xlane.xlu0 %899
    %v901 = vsel %vm837, %v881, 0.0
    %902 = vadd.xlane.f32.xlu0 %v901
    %v903 = vpop.xlane.xlu0 %902
    %v904 = vsel %vm837, %v883, 0.0
    %905 = vadd.xlane.f32.xlu0 %v904
    %v906 = vpop.xlane.xlu0 %905
    %v907 = vsel %vm837, %v885, 0.0
    %908 = vadd.xlane.f32.xlu0 %v907
    %v909 = vpop.xlane.xlu0 %908
    %v910 = vrcp.pop %v888
    %v911 = vmul.f32 %v871, %v910
    %v912 = vrcp.pop %v891
    %v913 = vmul.f32 %v873, %v912
    %v914 = vrcp.pop %v894
    %v915 = vmul.f32 %v875, %v914
    %v916 = vrcp.pop %v897
    %v917 = vmul.f32 %v877, %v916
    %v918 = vrcp.pop %v900
    %v919 = vmul.f32 %v879, %v918
    %v920 = vrcp.pop %v903
    %v921 = vmul.f32 %v881, %v920
    %v922 = vrcp.pop %v906
    %v923 = vmul.f32 %v883, %v922
    %v924 = vrcp.pop %v909
    %v925 = vmul.f32 %v885, %v924
    %927 = vrot.lane.b32.xlu0 %v206, 64
    %v928 = vpop.permute.xlu0 %927
    %v931 = vsel %vm837, %v911, 0
    %933 = vmatprep.subr.mxu0 0.0
    %934 = vmatpush1.msra.mxu0 %v928
    %935 = vmatprep.subr.mxu0 0.0
    %936 = vmatpush1.msra.mxu0 0.0
    %937 = vmatprep.subr.mxu0 0.0
    %938 = vmatpush1.msra.mxu0 0.0
    %939 = vmatprep.subr.mxu0 0.0
    %940 = vmatpush1.msra.mxu0 0.0
    %941 = vmatprep.subr.mxu0 0.0
    %942 = vmatpush1.msra.mxu0 0.0
    %943 = vmatprep.subr.mxu0 0.0
    %944 = vmatpush1.msra.mxu0 0.0
    %945 = vmatprep.subr.mxu0 0.0
    %946 = vmatpush1.msra.mxu0 0.0
    %947 = vmatprep.subr.mxu0 0.0
    %948 = vmatpush1.msra.mxu0 0.0
    %949 = vmatprep.subr.mxu0 0.0
    %950 = vmatpush1.msra.mxu0 0.0
    %951 = vmatprep.subr.mxu0 0.0
    %952 = vmatpush1.msra.mxu0 0.0
    %953 = vmatprep.subr.mxu0 0.0
    %954 = vmatpush1.msra.mxu0 0.0
    %955 = vmatprep.subr.mxu0 0.0
    %956 = vmatpush1.msra.mxu0 0.0
    %957 = vmatprep.subr.mxu0 0.0
    %958 = vmatpush1.msra.mxu0 0.0
    %959 = vmatprep.subr.mxu0 0.0
    %960 = vmatpush1.msra.mxu0 0.0
    %961 = vmatprep.subr.mxu0 0.0
    %962 = vmatpush1.msra.mxu0 0.0
    %963 = vmatprep.subr.mxu0 0.0
    %964 = vmatpush1.msra.mxu0 0.0
    %965 = vmatprep.subr.mxu0 0.0
    %966 = vmatpush1.msra.mxu0 0.0
    %967 = vmatprep.subr.mxu0 0.0
    %968 = vmatpush1.msra.mxu0 0.0
    %969 = vmatprep.subr.mxu0 0.0
    %970 = vmatpush1.msra.mxu0 0.0
    %971 = vmatprep.subr.mxu0 0.0
    %972 = vmatpush1.msra.mxu0 0.0
    %973 = vmatprep.subr.mxu0 0.0
    %974 = vmatpush1.msra.mxu0 0.0
    %975 = vmatprep.subr.mxu0 0.0
    %976 = vmatpush1.msra.mxu0 0.0
    %977 = vmatprep.subr.mxu0 0.0
    %978 = vmatpush1.msra.mxu0 0.0
    %979 = vmatprep.subr.mxu0 0.0
    %980 = vmatpush1.msra.mxu0 0.0
    %981 = vmatprep.subr.mxu0 0.0
    %982 = vmatpush1.msra.mxu0 0.0
    %983 = vmatprep.subr.mxu0 0.0
    %984 = vmatpush1.msra.mxu0 0.0
    %985 = vmatprep.subr.mxu0 0.0
    %986 = vmatpush1.msra.mxu0 0.0
    %987 = vmatprep.subr.mxu0 0.0
    %988 = vmatpush1.msra.mxu0 0.0
    %989 = vmatprep.subr.mxu0 0.0
    %990 = vmatpush1.msra.mxu0 0.0
    %991 = vmatprep.subr.mxu0 0.0
    %992 = vmatpush1.msra.mxu0 0.0
    %993 = vmatprep.subr.mxu0 0.0
    %994 = vmatpush1.msra.mxu0 0.0
    %995 = vmatprep.subr.mxu0 0.0
    %996 = vmatpush1.msra.mxu0 0.0
    %997 = vmatprep.mubr.f32.mxu0 0.0
    %998 = vmatmul.mubr.f32.gmra.mrb[0].mxu0 %v931
    %v999 = vpop.f32.mrb[0].mxu0
    %v1000 = vadd.f32 0.0, %v999
    %v1001 = vpop.f32.mrb[0].mxu0
    %1002 = vdwg.mxu0
    %1004 = vrot.lane.b32.xlu0 %v207, 64
    %v1005 = vpop.permute.xlu0 %1004
    %v1008 = vsel %vm837, %v913, 0
    %1010 = vmatprep.subr.mxu0 0.0
    %1011 = vmatpush1.msra.mxu0 %v1005
    %1012 = vmatprep.subr.mxu0 0.0
    %1013 = vmatpush1.msra.mxu0 0.0
    %1014 = vmatprep.subr.mxu0 0.0
    %1015 = vmatpush1.msra.mxu0 0.0
    %1016 = vmatprep.subr.mxu0 0.0
    %1017 = vmatpush1.msra.mxu0 0.0
    %1018 = vmatprep.subr.mxu0 0.0
    %1019 = vmatpush1.msra.mxu0 0.0
    %1020 = vmatprep.subr.mxu0 0.0
    %1021 = vmatpush1.msra.mxu0 0.0
    %1022 = vmatprep.subr.mxu0 0.0
    %1023 = vmatpush1.msra.mxu0 0.0
    %1024 = vmatprep.subr.mxu0 0.0
    %1025 = vmatpush1.msra.mxu0 0.0
    %1026 = vmatprep.subr.mxu0 0.0
    %1027 = vmatpush1.msra.mxu0 0.0
    %1028 = vmatprep.subr.mxu0 0.0
    %1029 = vmatpush1.msra.mxu0 0.0
    %1030 = vmatprep.subr.mxu0 0.0
    %1031 = vmatpush1.msra.mxu0 0.0
    %1032 = vmatprep.subr.mxu0 0.0
    %1033 = vmatpush1.msra.mxu0 0.0
    %1034 = vmatprep.subr.mxu0 0.0
    %1035 = vmatpush1.msra.mxu0 0.0
    %1036 = vmatprep.subr.mxu0 0.0
    %1037 = vmatpush1.msra.mxu0 0.0
    %1038 = vmatprep.subr.mxu0 0.0
    %1039 = vmatpush1.msra.mxu0 0.0
    %1040 = vmatprep.subr.mxu0 0.0
    %1041 = vmatpush1.msra.mxu0 0.0
    %1042 = vmatprep.subr.mxu0 0.0
    %1043 = vmatpush1.msra.mxu0 0.0
    %1044 = vmatprep.subr.mxu0 0.0
    %1045 = vmatpush1.msra.mxu0 0.0
    %1046 = vmatprep.subr.mxu0 0.0
    %1047 = vmatpush1.msra.mxu0 0.0
    %1048 = vmatprep.subr.mxu0 0.0
    %1049 = vmatpush1.msra.mxu0 0.0
    %1050 = vmatprep.subr.mxu0 0.0
    %1051 = vmatpush1.msra.mxu0 0.0
    %1052 = vmatprep.subr.mxu0 0.0
    %1053 = vmatpush1.msra.mxu0 0.0
    %1054 = vmatprep.subr.mxu0 0.0
    %1055 = vmatpush1.msra.mxu0 0.0
    %1056 = vmatprep.subr.mxu0 0.0
    %1057 = vmatpush1.msra.mxu0 0.0
    %1058 = vmatprep.subr.mxu0 0.0
    %1059 = vmatpush1.msra.mxu0 0.0
    %1060 = vmatprep.subr.mxu0 0.0
    %1061 = vmatpush1.msra.mxu0 0.0
    %1062 = vmatprep.subr.mxu0 0.0
    %1063 = vmatpush1.msra.mxu0 0.0
    %1064 = vmatprep.subr.mxu0 0.0
    %1065 = vmatpush1.msra.mxu0 0.0
    %1066 = vmatprep.subr.mxu0 0.0
    %1067 = vmatpush1.msra.mxu0 0.0
    %1068 = vmatprep.subr.mxu0 0.0
    %1069 = vmatpush1.msra.mxu0 0.0
    %1070 = vmatprep.subr.mxu0 0.0
    %1071 = vmatpush1.msra.mxu0 0.0
    %1072 = vmatprep.subr.mxu0 0.0
    %1073 = vmatpush1.msra.mxu0 0.0
    %1074 = vmatprep.mubr.f32.mxu0 0.0
    %1075 = vmatmul.mubr.f32.gmra.mrb[0].mxu0 %v1008
    %v1076 = vpop.f32.mrb[0].mxu0
    %v1077 = vadd.f32 0.0, %v1076
    %v1078 = vpop.f32.mrb[0].mxu0
    %1079 = vdwg.mxu0
    %1081 = vrot.lane.b32.xlu0 %v211, 64
    %v1082 = vpop.permute.xlu0 %1081
    %v1085 = vsel %vm837, %v915, 0
    %1087 = vmatprep.subr.mxu0 0.0
    %1088 = vmatpush1.msra.mxu0 %v1082
    %1089 = vmatprep.subr.mxu0 0.0
    %1090 = vmatpush1.msra.mxu0 0.0
    %1091 = vmatprep.subr.mxu0 0.0
    %1092 = vmatpush1.msra.mxu0 0.0
    %1093 = vmatprep.subr.mxu0 0.0
    %1094 = vmatpush1.msra.mxu0 0.0
    %1095 = vmatprep.subr.mxu0 0.0
    %1096 = vmatpush1.msra.mxu0 0.0
    %1097 = vmatprep.subr.mxu0 0.0
    %1098 = vmatpush1.msra.mxu0 0.0
    %1099 = vmatprep.subr.mxu0 0.0
    %1100 = vmatpush1.msra.mxu0 0.0
    %1101 = vmatprep.subr.mxu0 0.0
    %1102 = vmatpush1.msra.mxu0 0.0
    %1103 = vmatprep.subr.mxu0 0.0
    %1104 = vmatpush1.msra.mxu0 0.0
    %1105 = vmatprep.subr.mxu0 0.0
    %1106 = vmatpush1.msra.mxu0 0.0
    %1107 = vmatprep.subr.mxu0 0.0
    %1108 = vmatpush1.msra.mxu0 0.0
    %1109 = vmatprep.subr.mxu0 0.0
    %1110 = vmatpush1.msra.mxu0 0.0
    %1111 = vmatprep.subr.mxu0 0.0
    %1112 = vmatpush1.msra.mxu0 0.0
    %1113 = vmatprep.subr.mxu0 0.0
    %1114 = vmatpush1.msra.mxu0 0.0
    %1115 = vmatprep.subr.mxu0 0.0
    %1116 = vmatpush1.msra.mxu0 0.0
    %1117 = vmatprep.subr.mxu0 0.0
    %1118 = vmatpush1.msra.mxu0 0.0
    %1119 = vmatprep.subr.mxu0 0.0
    %1120 = vmatpush1.msra.mxu0 0.0
    %1121 = vmatprep.subr.mxu0 0.0
    %1122 = vmatpush1.msra.mxu0 0.0
    %1123 = vmatprep.subr.mxu0 0.0
    %1124 = vmatpush1.msra.mxu0 0.0
    %1125 = vmatprep.subr.mxu0 0.0
    %1126 = vmatpush1.msra.mxu0 0.0
    %1127 = vmatprep.subr.mxu0 0.0
    %1128 = vmatpush1.msra.mxu0 0.0
    %1129 = vmatprep.subr.mxu0 0.0
    %1130 = vmatpush1.msra.mxu0 0.0
    %1131 = vmatprep.subr.mxu0 0.0
    %1132 = vmatpush1.msra.mxu0 0.0
    %1133 = vmatprep.subr.mxu0 0.0
    %1134 = vmatpush1.msra.mxu0 0.0
    %1135 = vmatprep.subr.mxu0 0.0
    %1136 = vmatpush1.msra.mxu0 0.0
    %1137 = vmatprep.subr.mxu0 0.0
    %1138 = vmatpush1.msra.mxu0 0.0
    %1139 = vmatprep.subr.mxu0 0.0
    %1140 = vmatpush1.msra.mxu0 0.0
    %1141 = vmatprep.subr.mxu0 0.0
    %1142 = vmatpush1.msra.mxu0 0.0
    %1143 = vmatprep.subr.mxu0 0.0
    %1144 = vmatpush1.msra.mxu0 0.0
    %1145 = vmatprep.subr.mxu0 0.0
    %1146 = vmatpush1.msra.mxu0 0.0
    %1147 = vmatprep.subr.mxu0 0.0
    %1148 = vmatpush1.msra.mxu0 0.0
    %1149 = vmatprep.subr.mxu0 0.0
    %1150 = vmatpush1.msra.mxu0 0.0
    %1151 = vmatprep.mubr.f32.mxu0 0.0
    %1152 = vmatmul.mubr.f32.gmra.mrb[0].mxu0 %v1085
    %v1153 = vpop.f32.mrb[0].mxu0
    %v1154 = vadd.f32 0.0, %v1153
    %v1155 = vpop.f32.mrb[0].mxu0
    %1156 = vdwg.mxu0
    %1158 = vrot.lane.b32.xlu0 %v212, 64
    %v1159 = vpop.permute.xlu0 %1158
    %v1162 = vsel %vm837, %v917, 0
    %1164 = vmatprep.subr.mxu0 0.0
    %1165 = vmatpush1.msra.mxu0 %v1159
    %1166 = vmatprep.subr.mxu0 0.0
    %1167 = vmatpush1.msra.mxu0 0.0
    %1168 = vmatprep.subr.mxu0 0.0
    %1169 = vmatpush1.msra.mxu0 0.0
    %1170 = vmatprep.subr.mxu0 0.0
    %1171 = vmatpush1.msra.mxu0 0.0
    %1172 = vmatprep.subr.mxu0 0.0
    %1173 = vmatpush1.msra.mxu0 0.0
    %1174 = vmatprep.subr.mxu0 0.0
    %1175 = vmatpush1.msra.mxu0 0.0
    %1176 = vmatprep.subr.mxu0 0.0
    %1177 = vmatpush1.msra.mxu0 0.0
    %1178 = vmatprep.subr.mxu0 0.0
    %1179 = vmatpush1.msra.mxu0 0.0
    %1180 = vmatprep.subr.mxu0 0.0
    %1181 = vmatpush1.msra.mxu0 0.0
    %1182 = vmatprep.subr.mxu0 0.0
    %1183 = vmatpush1.msra.mxu0 0.0
    %1184 = vmatprep.subr.mxu0 0.0
    %1185 = vmatpush1.msra.mxu0 0.0
    %1186 = vmatprep.subr.mxu0 0.0
    %1187 = vmatpush1.msra.mxu0 0.0
    %1188 = vmatprep.subr.mxu0 0.0
    %1189 = vmatpush1.msra.mxu0 0.0
    %1190 = vmatprep.subr.mxu0 0.0
    %1191 = vmatpush1.msra.mxu0 0.0
    %1192 = vmatprep.subr.mxu0 0.0
    %1193 = vmatpush1.msra.mxu0 0.0
    %1194 = vmatprep.subr.mxu0 0.0
    %1195 = vmatpush1.msra.mxu0 0.0
    %1196 = vmatprep.subr.mxu0 0.0
    %1197 = vmatpush1.msra.mxu0 0.0
    %1198 = vmatprep.subr.mxu0 0.0
    %1199 = vmatpush1.msra.mxu0 0.0
    %1200 = vmatprep.subr.mxu0 0.0
    %1201 = vmatpush1.msra.mxu0 0.0
    %1202 = vmatprep.subr.mxu0 0.0
    %1203 = vmatpush1.msra.mxu0 0.0
    %1204 = vmatprep.subr.mxu0 0.0
    %1205 = vmatpush1.msra.mxu0 0.0
    %1206 = vmatprep.subr.mxu0 0.0
    %1207 = vmatpush1.msra.mxu0 0.0
    %1208 = vmatprep.subr.mxu0 0.0
    %1209 = vmatpush1.msra.mxu0 0.0
    %1210 = vmatprep.subr.mxu0 0.0
    %1211 = vmatpush1.msra.mxu0 0.0
    %1212 = vmatprep.subr.mxu0 0.0
    %1213 = vmatpush1.msra.mxu0 0.0
    %1214 = vmatprep.subr.mxu0 0.0
    %1215 = vmatpush1.msra.mxu0 0.0
    %1216 = vmatprep.subr.mxu0 0.0
    %1217 = vmatpush1.msra.mxu0 0.0
    %1218 = vmatprep.subr.mxu0 0.0
    %1219 = vmatpush1.msra.mxu0 0.0
    %1220 = vmatprep.subr.mxu0 0.0
    %1221 = vmatpush1.msra.mxu0 0.0
    %1222 = vmatprep.subr.mxu0 0.0
    %1223 = vmatpush1.msra.mxu0 0.0
    %1224 = vmatprep.subr.mxu0 0.0
    %1225 = vmatpush1.msra.mxu0 0.0
    %1226 = vmatprep.subr.mxu0 0.0
    %1227 = vmatpush1.msra.mxu0 0.0
    %1228 = vmatprep.mubr.f32.mxu0 0.0
    %1229 = vmatmul.mubr.f32.gmra.mrb[0].mxu0 %v1162
    %v1230 = vpop.f32.mrb[0].mxu0
    %v1231 = vadd.f32 0.0, %v1230
    %v1232 = vpop.f32.mrb[0].mxu0
    %1233 = vdwg.mxu0
    %1235 = vrot.lane.b32.xlu0 %v216, 64
    %v1236 = vpop.permute.xlu0 %1235
    %v1239 = vsel %vm837, %v919, 0
    %1241 = vmatprep.subr.mxu0 0.0
    %1242 = vmatpush1.msra.mxu0 %v1236
    %1243 = vmatprep.subr.mxu0 0.0
    %1244 = vmatpush1.msra.mxu0 0.0
    %1245 = vmatprep.subr.mxu0 0.0
    %1246 = vmatpush1.msra.mxu0 0.0
    %1247 = vmatprep.subr.mxu0 0.0
    %1248 = vmatpush1.msra.mxu0 0.0
    %1249 = vmatprep.subr.mxu0 0.0
    %1250 = vmatpush1.msra.mxu0 0.0
    %1251 = vmatprep.subr.mxu0 0.0
    %1252 = vmatpush1.msra.mxu0 0.0
    %1253 = vmatprep.subr.mxu0 0.0
    %1254 = vmatpush1.msra.mxu0 0.0
    %1255 = vmatprep.subr.mxu0 0.0
    %1256 = vmatpush1.msra.mxu0 0.0
    %1257 = vmatprep.subr.mxu0 0.0
    %1258 = vmatpush1.msra.mxu0 0.0
    %1259 = vmatprep.subr.mxu0 0.0
    %1260 = vmatpush1.msra.mxu0 0.0
    %1261 = vmatprep.subr.mxu0 0.0
    %1262 = vmatpush1.msra.mxu0 0.0
    %1263 = vmatprep.subr.mxu0 0.0
    %1264 = vmatpush1.msra.mxu0 0.0
    %1265 = vmatprep.subr.mxu0 0.0
    %1266 = vmatpush1.msra.mxu0 0.0
    %1267 = vmatprep.subr.mxu0 0.0
    %1268 = vmatpush1.msra.mxu0 0.0
    %1269 = vmatprep.subr.mxu0 0.0
    %1270 = vmatpush1.msra.mxu0 0.0
    %1271 = vmatprep.subr.mxu0 0.0
    %1272 = vmatpush1.msra.mxu0 0.0
    %1273 = vmatprep.subr.mxu0 0.0
    %1274 = vmatpush1.msra.mxu0 0.0
    %1275 = vmatprep.subr.mxu0 0.0
    %1276 = vmatpush1.msra.mxu0 0.0
    %1277 = vmatprep.subr.mxu0 0.0
    %1278 = vmatpush1.msra.mxu0 0.0
    %1279 = vmatprep.subr.mxu0 0.0
    %1280 = vmatpush1.msra.mxu0 0.0
    %1281 = vmatprep.subr.mxu0 0.0
    %1282 = vmatpush1.msra.mxu0 0.0
    %1283 = vmatprep.subr.mxu0 0.0
    %1284 = vmatpush1.msra.mxu0 0.0
    %1285 = vmatprep.subr.mxu0 0.0
    %1286 = vmatpush1.msra.mxu0 0.0
    %1287 = vmatprep.subr.mxu0 0.0
    %1288 = vmatpush1.msra.mxu0 0.0
    %1289 = vmatprep.subr.mxu0 0.0
    %1290 = vmatpush1.msra.mxu0 0.0
    %1291 = vmatprep.subr.mxu0 0.0
    %1292 = vmatpush1.msra.mxu0 0.0
    %1293 = vmatprep.subr.mxu0 0.0
    %1294 = vmatpush1.msra.mxu0 0.0
    %1295 = vmatprep.subr.mxu0 0.0
    %1296 = vmatpush1.msra.mxu0 0.0
    %1297 = vmatprep.subr.mxu0 0.0
    %1298 = vmatpush1.msra.mxu0 0.0
    %1299 = vmatprep.subr.mxu0 0.0
    %1300 = vmatpush1.msra.mxu0 0.0
    %1301 = vmatprep.subr.mxu0 0.0
    %1302 = vmatpush1.msra.mxu0 0.0
    %1303 = vmatprep.subr.mxu0 0.0
    %1304 = vmatpush1.msra.mxu0 0.0
    %1305 = vmatprep.mubr.f32.mxu0 0.0
    %1306 = vmatmul.mubr.f32.gmra.mrb[0].mxu0 %v1239
    %v1307 = vpop.f32.mrb[0].mxu0
    %v1308 = vadd.f32 0.0, %v1307
    %v1309 = vpop.f32.mrb[0].mxu0
    %1310 = vdwg.mxu0
    %1312 = vrot.lane.b32.xlu0 %v217, 64
    %v1313 = vpop.permute.xlu0 %1312
    %v1316 = vsel %vm837, %v921, 0
    %1318 = vmatprep.subr.mxu0 0.0
    %1319 = vmatpush1.msra.mxu0 %v1313
    %1320 = vmatprep.subr.mxu0 0.0
    %1321 = vmatpush1.msra.mxu0 0.0
    %1322 = vmatprep.subr.mxu0 0.0
    %1323 = vmatpush1.msra.mxu0 0.0
    %1324 = vmatprep.subr.mxu0 0.0
    %1325 = vmatpush1.msra.mxu0 0.0
    %1326 = vmatprep.subr.mxu0 0.0
    %1327 = vmatpush1.msra.mxu0 0.0
    %1328 = vmatprep.subr.mxu0 0.0
    %1329 = vmatpush1.msra.mxu0 0.0
    %1330 = vmatprep.subr.mxu0 0.0
    %1331 = vmatpush1.msra.mxu0 0.0
    %1332 = vmatprep.subr.mxu0 0.0
    %1333 = vmatpush1.msra.mxu0 0.0
    %1334 = vmatprep.subr.mxu0 0.0
    %1335 = vmatpush1.msra.mxu0 0.0
    %1336 = vmatprep.subr.mxu0 0.0
    %1337 = vmatpush1.msra.mxu0 0.0
    %1338 = vmatprep.subr.mxu0 0.0
    %1339 = vmatpush1.msra.mxu0 0.0
    %1340 = vmatprep.subr.mxu0 0.0
    %1341 = vmatpush1.msra.mxu0 0.0
    %1342 = vmatprep.subr.mxu0 0.0
    %1343 = vmatpush1.msra.mxu0 0.0
    %1344 = vmatprep.subr.mxu0 0.0
    %1345 = vmatpush1.msra.mxu0 0.0
    %1346 = vmatprep.subr.mxu0 0.0
    %1347 = vmatpush1.msra.mxu0 0.0
    %1348 = vmatprep.subr.mxu0 0.0
    %1349 = vmatpush1.msra.mxu0 0.0
    %1350 = vmatprep.subr.mxu0 0.0
    %1351 = vmatpush1.msra.mxu0 0.0
    %1352 = vmatprep.subr.mxu0 0.0
    %1353 = vmatpush1.msra.mxu0 0.0
    %1354 = vmatprep.subr.mxu0 0.0
    %1355 = vmatpush1.msra.mxu0 0.0
    %1356 = vmatprep.subr.mxu0 0.0
    %1357 = vmatpush1.msra.mxu0 0.0
    %1358 = vmatprep.subr.mxu0 0.0
    %1359 = vmatpush1.msra.mxu0 0.0
    %1360 = vmatprep.subr.mxu0 0.0
    %1361 = vmatpush1.msra.mxu0 0.0
    %1362 = vmatprep.subr.mxu0 0.0
    %1363 = vmatpush1.msra.mxu0 0.0
    %1364 = vmatprep.subr.mxu0 0.0
    %1365 = vmatpush1.msra.mxu0 0.0
    %1366 = vmatprep.subr.mxu0 0.0
    %1367 = vmatpush1.msra.mxu0 0.0
    %1368 = vmatprep.subr.mxu0 0.0
    %1369 = vmatpush1.msra.mxu0 0.0
    %1370 = vmatprep.subr.mxu0 0.0
    %1371 = vmatpush1.msra.mxu0 0.0
    %1372 = vmatprep.subr.mxu0 0.0
    %1373 = vmatpush1.msra.mxu0 0.0
    %1374 = vmatprep.subr.mxu0 0.0
    %1375 = vmatpush1.msra.mxu0 0.0
    %1376 = vmatprep.subr.mxu0 0.0
    %1377 = vmatpush1.msra.mxu0 0.0
    %1378 = vmatprep.subr.mxu0 0.0
    %1379 = vmatpush1.msra.mxu0 0.0
    %1380 = vmatprep.subr.mxu0 0.0
    %1381 = vmatpush1.msra.mxu0 0.0
    %1382 = vmatprep.mubr.f32.mxu0 0.0
    %1383 = vmatmul.mubr.f32.gmra.mrb[0].mxu0 %v1316
    %v1384 = vpop.f32.mrb[0].mxu0
    %v1385 = vadd.f32 0.0, %v1384
    %v1386 = vpop.f32.mrb[0].mxu0
    %1387 = vdwg.mxu0
    %1389 = vrot.lane.b32.xlu0 %v221, 64
    %v1390 = vpop.permute.xlu0 %1389
    %v1393 = vsel %vm837, %v923, 0
    %1395 = vmatprep.subr.mxu0 0.0
    %1396 = vmatpush1.msra.mxu0 %v1390
    %1397 = vmatprep.subr.mxu0 0.0
    %1398 = vmatpush1.msra.mxu0 0.0
    %1399 = vmatprep.subr.mxu0 0.0
    %1400 = vmatpush1.msra.mxu0 0.0
    %1401 = vmatprep.subr.mxu0 0.0
    %1402 = vmatpush1.msra.mxu0 0.0
    %1403 = vmatprep.subr.mxu0 0.0
    %1404 = vmatpush1.msra.mxu0 0.0
    %1405 = vmatprep.subr.mxu0 0.0
    %1406 = vmatpush1.msra.mxu0 0.0
    %1407 = vmatprep.subr.mxu0 0.0
    %1408 = vmatpush1.msra.mxu0 0.0
    %1409 = vmatprep.subr.mxu0 0.0
    %1410 = vmatpush1.msra.mxu0 0.0
    %1411 = vmatprep.subr.mxu0 0.0
    %1412 = vmatpush1.msra.mxu0 0.0
    %1413 = vmatprep.subr.mxu0 0.0
    %1414 = vmatpush1.msra.mxu0 0.0
    %1415 = vmatprep.subr.mxu0 0.0
    %1416 = vmatpush1.msra.mxu0 0.0
    %1417 = vmatprep.subr.mxu0 0.0
    %1418 = vmatpush1.msra.mxu0 0.0
    %1419 = vmatprep.subr.mxu0 0.0
    %1420 = vmatpush1.msra.mxu0 0.0
    %1421 = vmatprep.subr.mxu0 0.0
    %1422 = vmatpush1.msra.mxu0 0.0
    %1423 = vmatprep.subr.mxu0 0.0
    %1424 = vmatpush1.msra.mxu0 0.0
    %1425 = vmatprep.subr.mxu0 0.0
    %1426 = vmatpush1.msra.mxu0 0.0
    %1427 = vmatprep.subr.mxu0 0.0
    %1428 = vmatpush1.msra.mxu0 0.0
    %1429 = vmatprep.subr.mxu0 0.0
    %1430 = vmatpush1.msra.mxu0 0.0
    %1431 = vmatprep.subr.mxu0 0.0
    %1432 = vmatpush1.msra.mxu0 0.0
    %1433 = vmatprep.subr.mxu0 0.0
    %1434 = vmatpush1.msra.mxu0 0.0
    %1435 = vmatprep.subr.mxu0 0.0
    %1436 = vmatpush1.msra.mxu0 0.0
    %1437 = vmatprep.subr.mxu0 0.0
    %1438 = vmatpush1.msra.mxu0 0.0
    %1439 = vmatprep.subr.mxu0 0.0
    %1440 = vmatpush1.msra.mxu0 0.0
    %1441 = vmatprep.subr.mxu0 0.0
    %1442 = vmatpush1.msra.mxu0 0.0
    %1443 = vmatprep.subr.mxu0 0.0
    %1444 = vmatpush1.msra.mxu0 0.0
    %1445 = vmatprep.subr.mxu0 0.0
    %1446 = vmatpush1.msra.mxu0 0.0
    %1447 = vmatprep.subr.mxu0 0.0
    %1448 = vmatpush1.msra.mxu0 0.0
    %1449 = vmatprep.subr.mxu0 0.0
    %1450 = vmatpush1.msra.mxu0 0.0
    %1451 = vmatprep.subr.mxu0 0.0
    %1452 = vmatpush1.msra.mxu0 0.0
    %1453 = vmatprep.subr.mxu0 0.0
    %1454 = vmatpush1.msra.mxu0 0.0
    %1455 = vmatprep.subr.mxu0 0.0
    %1456 = vmatpush1.msra.mxu0 0.0
    %1457 = vmatprep.subr.mxu0 0.0
    %1458 = vmatpush1.msra.mxu0 0.0
    %1459 = vmatprep.mubr.f32.mxu0 0.0
    %1460 = vmatmul.mubr.f32.gmra.mrb[0].mxu0 %v1393
    %v1461 = vpop.f32.mrb[0].mxu0
    %v1462 = vadd.f32 0.0, %v1461
    %v1463 = vpop.f32.mrb[0].mxu0
    %1464 = vdwg.mxu0
    %1466 = vrot.lane.b32.xlu0 %v222, 64
    %v1467 = vpop.permute.xlu0 %1466
    %v1470 = vsel %vm837, %v925, 0
    %1472 = vmatprep.subr.mxu0 0.0
    %1473 = vmatpush1.msra.mxu0 %v1467
    %1474 = vmatprep.subr.mxu0 0.0
    %1475 = vmatpush1.msra.mxu0 0.0
    %1476 = vmatprep.subr.mxu0 0.0
    %1477 = vmatpush1.msra.mxu0 0.0
    %1478 = vmatprep.subr.mxu0 0.0
    %1479 = vmatpush1.msra.mxu0 0.0
    %1480 = vmatprep.subr.mxu0 0.0
    %1481 = vmatpush1.msra.mxu0 0.0
    %1482 = vmatprep.subr.mxu0 0.0
    %1483 = vmatpush1.msra.mxu0 0.0
    %1484 = vmatprep.subr.mxu0 0.0
    %1485 = vmatpush1.msra.mxu0 0.0
    %1486 = vmatprep.subr.mxu0 0.0
    %1487 = vmatpush1.msra.mxu0 0.0
    %1488 = vmatprep.subr.mxu0 0.0
    %1489 = vmatpush1.msra.mxu0 0.0
    %1490 = vmatprep.subr.mxu0 0.0
    %1491 = vmatpush1.msra.mxu0 0.0
    %1492 = vmatprep.subr.mxu0 0.0
    %1493 = vmatpush1.msra.mxu0 0.0
    %1494 = vmatprep.subr.mxu0 0.0
    %1495 = vmatpush1.msra.mxu0 0.0
    %1496 = vmatprep.subr.mxu0 0.0
    %1497 = vmatpush1.msra.mxu0 0.0
    %1498 = vmatprep.subr.mxu0 0.0
    %1499 = vmatpush1.msra.mxu0 0.0
    %1500 = vmatprep.subr.mxu0 0.0
    %1501 = vmatpush1.msra.mxu0 0.0
    %1502 = vmatprep.subr.mxu0 0.0
    %1503 = vmatpush1.msra.mxu0 0.0
    %1504 = vmatprep.subr.mxu0 0.0
    %1505 = vmatpush1.msra.mxu0 0.0
    %1506 = vmatprep.subr.mxu0 0.0
    %1507 = vmatpush1.msra.mxu0 0.0
    %1508 = vmatprep.subr.mxu0 0.0
    %1509 = vmatpush1.msra.mxu0 0.0
    %1510 = vmatprep.subr.mxu0 0.0
    %1511 = vmatpush1.msra.mxu0 0.0
    %1512 = vmatprep.subr.mxu0 0.0
    %1513 = vmatpush1.msra.mxu0 0.0
    %1514 = vmatprep.subr.mxu0 0.0
    %1515 = vmatpush1.msra.mxu0 0.0
    %1516 = vmatprep.subr.mxu0 0.0
    %1517 = vmatpush1.msra.mxu0 0.0
    %1518 = vmatprep.subr.mxu0 0.0
    %1519 = vmatpush1.msra.mxu0 0.0
    %1520 = vmatprep.subr.mxu0 0.0
    %1521 = vmatpush1.msra.mxu0 0.0
    %1522 = vmatprep.subr.mxu0 0.0
    %1523 = vmatpush1.msra.mxu0 0.0
    %1524 = vmatprep.subr.mxu0 0.0
    %1525 = vmatpush1.msra.mxu0 0.0
    %1526 = vmatprep.subr.mxu0 0.0
    %1527 = vmatpush1.msra.mxu0 0.0
    %1528 = vmatprep.subr.mxu0 0.0
    %1529 = vmatpush1.msra.mxu0 0.0
    %1530 = vmatprep.subr.mxu0 0.0
    %1531 = vmatpush1.msra.mxu0 0.0
    %1532 = vmatprep.subr.mxu0 0.0
    %1533 = vmatpush1.msra.mxu0 0.0
    %1534 = vmatprep.subr.mxu0 0.0
    %1535 = vmatpush1.msra.mxu0 0.0
    %1536 = vmatprep.mubr.f32.mxu0 0.0
    %1537 = vmatmul.mubr.f32.gmra.mrb[0].mxu0 %v1470
    %v1538 = vpop.f32.mrb[0].mxu0
    %v1539 = vadd.f32 0.0, %v1538
    %v1540 = vpop.f32.mrb[0].mxu0
    %1541 = vdwg.mxu0
    %v1542 = vadd.f32 %v1000, %v1154
    %v1543 = vadd.f32 %v1077, %v1231
    %v1544 = vadd.f32 %v1542, %v1308
    %v1545 = vadd.f32 %v1543, %v1385
    %v1546 = vadd.f32 %v1544, %v1462
    %v1547 = vadd.f32 %v1545, %v1539
    %v1548 = vld [vmem:[#allocation7] sm:$0xff]
    %v1549 = vld [vmem:[#allocation7 + $0x8] sm:$0xff]
    %v1550 = vld [vmem:[#allocation7 + $0x10] sm:$0xff]
    %v1551 = vld [vmem:[#allocation7 + $0x18] sm:$0xff]
    %v1552 = vld [vmem:[%s4] sm:$0x1]
    %v1554 = vlaneseq
    %v1555 = vshrl.u32 %v1554, 7
    %v1556 = vsub.s32 0, %v1555
    %v1557 = vrot.slane %v1552, %v1556
    %v1560 = vsel %vm75, %v1546, 0
    %v1563 = vsel %vm75, %v1547, 0
    %1565 = vmatprep.subr.mxu0 0.0
    %1566 = vmatpush1.msra.mxu0 %v1548
    %1567 = vmatprep.subr.mxu0 0.0
    %1568 = vmatpush1.msra.mxu0 %v1549
    %1569 = vmatprep.subr.mxu0 0.0
    %1570 = vmatpush1.msra.mxu0 %v1550
    %1571 = vmatprep.subr.mxu0 0.0
    %1572 = vmatpush1.msra.mxu0 %v1551
    %1573 = vmatprep.subr.mxu0 0.0
    %1574 = vmatpush1.msra.mxu0 0.0
    %1575 = vmatprep.subr.mxu0 0.0
    %1576 = vmatpush1.msra.mxu0 0.0
    %1577 = vmatprep.subr.mxu0 0.0
    %1578 = vmatpush1.msra.mxu0 0.0
    %1579 = vmatprep.subr.mxu0 0.0
    %1580 = vmatpush1.msra.mxu0 0.0
    %1581 = vmatprep.subr.mxu0 0.0
    %1582 = vmatpush1.msra.mxu0 0.0
    %1583 = vmatprep.subr.mxu0 0.0
    %1584 = vmatpush1.msra.mxu0 0.0
    %1585 = vmatprep.subr.mxu0 0.0
    %1586 = vmatpush1.msra.mxu0 0.0
    %1587 = vmatprep.subr.mxu0 0.0
    %1588 = vmatpush1.msra.mxu0 0.0
    %1589 = vmatprep.subr.mxu0 0.0
    %1590 = vmatpush1.msra.mxu0 0.0
    %1591 = vmatprep.subr.mxu0 0.0
    %1592 = vmatpush1.msra.mxu0 0.0
    %1593 = vmatprep.subr.mxu0 0.0
    %1594 = vmatpush1.msra.mxu0 0.0
    %1595 = vmatprep.subr.mxu0 0.0
    %1596 = vmatpush1.msra.mxu0 0.0
    %1597 = vmatprep.subr.mxu0 0.0
    %1598 = vmatpush1.msra.mxu0 0.0
    %1599 = vmatprep.subr.mxu0 0.0
    %1600 = vmatpush1.msra.mxu0 0.0
    %1601 = vmatprep.subr.mxu0 0.0
    %1602 = vmatpush1.msra.mxu0 0.0
    %1603 = vmatprep.subr.mxu0 0.0
    %1604 = vmatpush1.msra.mxu0 0.0
    %1605 = vmatprep.subr.mxu0 0.0
    %1606 = vmatpush1.msra.mxu0 0.0
    %1607 = vmatprep.subr.mxu0 0.0
    %1608 = vmatpush1.msra.mxu0 0.0
    %1609 = vmatprep.subr.mxu0 0.0
    %1610 = vmatpush1.msra.mxu0 0.0
    %1611 = vmatprep.subr.mxu0 0.0
    %1612 = vmatpush1.msra.mxu0 0.0
    %1613 = vmatprep.subr.mxu0 0.0
    %1614 = vmatpush1.msra.mxu0 0.0
    %1615 = vmatprep.subr.mxu0 0.0
    %1616 = vmatpush1.msra.mxu0 0.0
    %1617 = vmatprep.subr.mxu0 0.0
    %1618 = vmatpush1.msra.mxu0 0.0
    %1619 = vmatprep.subr.mxu0 0.0
    %1620 = vmatpush1.msra.mxu0 0.0
    %1621 = vmatprep.subr.mxu0 0.0
    %1622 = vmatpush1.msra.mxu0 0.0
    %1623 = vmatprep.subr.mxu0 0.0
    %1624 = vmatpush1.msra.mxu0 0.0
    %1625 = vmatprep.subr.mxu0 0.0
    %1626 = vmatpush1.msra.mxu0 0.0
    %1627 = vmatprep.subr.mxu0 0.0
    %1628 = vmatpush1.msra.mxu0 0.0
    %1629 = vmatprep.mubr.f32.mxu0 0.0
    %1630 = vmatmul.mubr.f32.gmra.mrb[0].mxu0 %v1560
    %v1631 = vpop.f32.mrb[0].mxu0
    %v1632 = vadd.f32 %v1557, %v1631
    %v1633 = vpop.f32.mrb[0].mxu0
    %1634 = vmatprep.mubr.f32.mxu0 0.0
    %1635 = vmatmul.mubr.f32.gmra.mrb[0].mxu0 %v1563
    %v1636 = vpop.f32.mrb[0].mxu0
    %v1637 = vadd.f32 %v1557, %v1636
    %v1638 = vpop.f32.mrb[0].mxu0
    %1639 = vdwg.mxu0
    %1640 = vst [vmem:[#allocation8] sm:$0xff] %v1632
    %1641 = vst [vmem:[#allocation8 + $0x8] sm:$0xff] %v1637
    // Predicated region
    $region34: #{tpu_custom_call.1} parent=1 // pred_check
      _
    $region35: #{tpu_custom_call.1} parent=1 // pred_check_branch
      %1643 = sbr.rel (0) target = $region37
    $region36: #{tpu_custom_call.1} parent=1 // pred_region
      %s1645 = ssub.s32 256, 256
      %1646 = vsyncadd [#allocation4], %s1645
      %s1647 = sshll.u32 [#allocation8], 4
      %s1648 = int_to_ptr.vmem [resolvable:$true] %s1647
      %1653 = dma.vmem_to_hbm [thread:$0]  %s1648, 256, %s5, [#allocation4], 128, 128, 8
    $region37: #{tpu_custom_call.1} parent=1 // pred_fallthru
      _
    // Predicated region
    $region38: #{tpu_custom_call.1} parent=1 // pred_check
      _
    $region39: #{tpu_custom_call.1} parent=1 // pred_check_branch
      %1655 = sbr.rel (0) target = $region41
    $region40: #{tpu_custom_call.1} parent=1 // pred_region
      %1656 = dma.done [#allocation4], 256
    $region41: #{tpu_custom_call.1} parent=1 // pred_fallthru
      _
    %1657 = vsyncpa [#allocation3], 1
    %1658 = vsyncpa [#allocation6], 1
    %1659 = vsyncpa [#allocation4], 1

</llo_original>
